<compile_context>
chip_gen: v7x
topology: tpu7x:2x2x1
jax: 0.10.0
libtpu: 0.0.40
codegen_flags: <defaults>
</compile_context>

<pallas_src>
import functools

import jax
import jax.numpy as jnp
from jax.experimental import pallas as pl
from jax.experimental.pallas import tpu as pltpu


def _choose_q_tile(S: int) -> int:
    """Largest query-row tile that evenly divides S (keeps blocks (8,128)-friendly)."""
    for ts in (512, 256, 128):
        if S % ts == 0:
            return ts
    return S


# ------------------------- fused encoder-block kernel ------------------------
def _encoder_block_kernel(x_ref, wq_ref, bq_ref, wk_ref, bk_ref, wv_ref, bv_ref,
                          wo_ref, bo_ref, w1_ref, b1_ref, w2_ref, b2_ref,
                          o_ref, ctx_scratch,
                          *, num_heads, head_dim, q_tile, scale):
    si = pl.program_id(1)

    x_all = x_ref[0]                                        # (S, D) bf16, full sequence
    q_start = pl.multiple_of(si * q_tile, q_tile)
    x_q = x_ref[0, pl.ds(q_start, q_tile), :]               # (TS, D) bf16, this query tile

    # Head-fused projections: single wide matmuls, f32 accumulation, f32 biases.
    k = jnp.dot(x_all, wk_ref[...], preferred_element_type=jnp.float32) + bk_ref[...]
    v = jnp.dot(x_all, wv_ref[...], preferred_element_type=jnp.float32) + bv_ref[...]
    q = jnp.dot(x_q,   wq_ref[...], preferred_element_type=jnp.float32) + bq_ref[...]
    q = q * scale                                           # fold 1/sqrt(dh) into small q tile

    q_bf = q.astype(jnp.bfloat16)
    k_bf = k.astype(jnp.bfloat16)
    v_bf = v.astype(jnp.bfloat16)

    # Per-head attention; each head's context lands at lane offset h*dh of the scratch.
    for h in range(num_heads):
        lo = h * head_dim
        hi = lo + head_dim
        qh, kh, vh = q_bf[:, lo:hi], k_bf[:, lo:hi], v_bf[:, lo:hi]
        # scores[s, t] = <q_s, k_t>   (contract over head dim)
        scores = jax.lax.dot_general(qh, kh, (((1,), (1,)), ((), ())),
                                     preferred_element_type=jnp.float32)   # (TS, S)
        scores = scores - jnp.max(scores, axis=-1, keepdims=True)
        p = jnp.exp(scores)
        inv = pl.reciprocal(jnp.sum(p, axis=-1, keepdims=True), approx=True)
        attn = (p * inv).astype(jnp.bfloat16)
        ctx_scratch[:, lo:hi] = jnp.dot(attn, vh, preferred_element_type=jnp.float32)

    # One fused Wo matmul over all heads (K = D), then the position-wise FFN.
    ctx = ctx_scratch[...].astype(jnp.bfloat16)                                 # (TS, D)
    ao = jnp.dot(ctx, wo_ref[...], preferred_element_type=jnp.float32) + bo_ref[...]

    hid = jnp.dot(ao.astype(jnp.bfloat16), w1_ref[...],
                  preferred_element_type=jnp.float32) + b1_ref[...]
    hid = jnp.maximum(hid, 0.0).astype(jnp.bfloat16)                            # ReLU
    out = jnp.dot(hid, w2_ref[...], preferred_element_type=jnp.float32) + b2_ref[...]

    o_ref[0] = out.astype(o_ref.dtype)                      # single lane-dense store


# --------------------------------- wrapper -----------------------------------
def encoder_block(x, params):
    B, S, D = x.shape
    H, _, dh = params["wq"].shape
    Dff = params["w1"].shape[1]
    assert H * dh == D
    TS = _choose_q_tile(S)
    n_s_tiles = S // TS
    scale = 1.0 / (dh ** 0.5)

    bf16, f32 = jnp.bfloat16, jnp.float32
    x_bf = x.astype(bf16)
    # Head-fused weight layouts: columns (rows for wo) ordered [head0 | head1 | ...].
    wq = params["wq"].transpose(1, 0, 2).reshape(D, D).astype(bf16)
    wk = params["wk"].transpose(1, 0, 2).reshape(D, D).astype(bf16)
    wv = params["wv"].transpose(1, 0, 2).reshape(D, D).astype(bf16)
    wo = params["wo"].reshape(D, D).astype(bf16)
    bq = params["bq"].reshape(1, D).astype(f32)
    bk = params["bk"].reshape(1, D).astype(f32)
    bv = params["bv"].reshape(1, D).astype(f32)
    bo = params["bo"].reshape(1, D).astype(f32)
    w1 = params["w1"].astype(bf16)
    b1 = params["b1"].reshape(1, Dff).astype(f32)
    w2 = params["w2"].astype(bf16)
    b2 = params["b2"].reshape(1, D).astype(f32)

    kernel = functools.partial(_encoder_block_kernel, num_heads=H, head_dim=dh,
                               q_tile=TS, scale=scale)
    const = lambda b, s: (0, 0)

    return pl.pallas_call(
        kernel,
        out_shape=jax.ShapeDtypeStruct((B, S, D), jnp.float32),
        grid_spec=pltpu.PrefetchScalarGridSpec(
            num_scalar_prefetch=0,
            grid=(B, n_s_tiles),
            in_specs=[
                pl.BlockSpec((1, S, D), lambda b, s: (b, 0, 0)),   # x: full sequence per batch
                pl.BlockSpec((D, D), const),                       # wq (head-fused)
                pl.BlockSpec((1, D), const),                       # bq
                pl.BlockSpec((D, D), const),                       # wk
                pl.BlockSpec((1, D), const),                       # bk
                pl.BlockSpec((D, D), const),                       # wv
                pl.BlockSpec((1, D), const),                       # bv
                pl.BlockSpec((D, D), const),                       # wo (head-fused)
                pl.BlockSpec((1, D), const),                       # bo
                pl.BlockSpec((D, Dff), const),                     # w1
                pl.BlockSpec((1, Dff), const),                     # b1
                pl.BlockSpec((Dff, D), const),                     # w2
                pl.BlockSpec((1, D), const),                       # b2
            ],
            out_specs=pl.BlockSpec((1, TS, D), lambda b, s: (b, s, 0)),
            scratch_shapes=[pltpu.VMEM((TS, D), jnp.float32)],     # per-head ctx accumulator
        ),
        compiler_params=pltpu.CompilerParams(
            dimension_semantics=("parallel", "parallel"),
            # Raise the default scoped-VMEM cap (16/32 MiB) for bigger tiles;
            # 48 MiB stays below every generation's physical VMEM (incl. v7x's 64 MiB).
            vmem_limit_bytes=48 * 1024 * 1024),
    )(x_bf, wq, bq, wk, bk, wv, bv, wo, bo, w1, b1, w2, b2)


# ----------------------------- pure-JAX reference -----------------------------
def encoder_block_ref(x, p):
    dh = p["wq"].shape[-1]
    q = jnp.einsum("bsd,hde->bhse", x, p["wq"]) + p["bq"][None, :, :, :]
    k = jnp.einsum("bsd,hde->bhse", x, p["wk"]) + p["bk"][None, :, :, :]
    v = jnp.einsum("bsd,hde->bhse", x, p["wv"]) + p["bv"][None, :, :, :]
    scores = jnp.einsum("bhse,bhte->bhst", q, k) / (dh ** 0.5)
    attn = jax.nn.softmax(scores, axis=-1)
    ctx = jnp.einsum("bhst,bhte->bhse", attn, v)
    ao = jnp.einsum("bhse,hed->bsd", ctx, p["wo"]) + p["bo"][None, :, :]
    hid = jax.nn.relu(jnp.einsum("bsd,df->bsf", ao, p["w1"]) + p["b1"][None, :, :])
    return jnp.einsum("bsf,fd->bsd", hid, p["w2"]) + p["b2"][None, :, :]


def init_params(key, D, H, Dff):
    dh = D // H
    keys = jax.random.split(key, 10)
    s = 0.05
    return {
        "wq": s * jax.random.normal(keys[0], (H, D, dh), jnp.float32),
        "bq": s * jax.random.normal(keys[1], (H, 1, dh), jnp.float32),
        "wk": s * jax.random.normal(keys[2], (H, D, dh), jnp.float32),
        "bk": s * jax.random.normal(keys[3], (H, 1, dh), jnp.float32),
        "wv": s * jax.random.normal(keys[4], (H, D, dh), jnp.float32),
        "bv": s * jax.random.normal(keys[5], (H, 1, dh), jnp.float32),
        "wo": s * jax.random.normal(keys[6], (H, dh, D), jnp.float32),
        "bo": s * jax.random.normal(keys[7], (1, D), jnp.float32),
        "w1": s * jax.random.normal(keys[8], (D, Dff), jnp.float32),
        "b1": jnp.zeros((1, Dff), jnp.float32),
        "w2": s * jax.random.normal(keys[9], (Dff, D), jnp.float32),
        "b2": jnp.zeros((1, D), jnp.float32),
    }


if __name__ == "__main__":
    B, S, D, H, Dff = 2, 8, 32, 4, 64

    key = jax.random.PRNGKey(0)
    kx, kp = jax.random.split(key)
    x = jax.random.normal(kx, (B, S, D), jnp.float32)
    params = init_params(kp, D, H, Dff)

    out = jax.block_until_ready(encoder_block(x, params))
    ref = jax.block_until_ready(encoder_block_ref(x, params))

    assert out.shape == (B, S, D)
    err = float(jnp.max(jnp.abs(out - ref)))
    # bf16 matmul operands -> relaxed tolerance vs. the f32 reference.
    assert jnp.allclose(out, ref, atol=2e-2, rtol=2e-2), f"mismatch vs reference (max |err|={err})"
    print("KERNEL_OK")
</pallas_src>

<mosaic_0001>
module attributes {stable_mosaic.version = 11 : i64} {
  func.func @_encoder_block_kernel(%arg0: i32, %arg1: i32, %arg2: memref<1x8x32xbf16, #tpu.memory_space<vmem>>, %arg3: memref<32x32xbf16, #tpu.memory_space<vmem>>, %arg4: memref<1x32xf32, #tpu.memory_space<vmem>>, %arg5: memref<32x32xbf16, #tpu.memory_space<vmem>>, %arg6: memref<1x32xf32, #tpu.memory_space<vmem>>, %arg7: memref<32x32xbf16, #tpu.memory_space<vmem>>, %arg8: memref<1x32xf32, #tpu.memory_space<vmem>>, %arg9: memref<32x32xbf16, #tpu.memory_space<vmem>>, %arg10: memref<1x32xf32, #tpu.memory_space<vmem>>, %arg11: memref<32x64xbf16, #tpu.memory_space<vmem>>, %arg12: memref<1x64xf32, #tpu.memory_space<vmem>>, %arg13: memref<64x32xbf16, #tpu.memory_space<vmem>>, %arg14: memref<1x32xf32, #tpu.memory_space<vmem>>, %arg15: memref<1x8x32xf32, #tpu.memory_space<vmem>>, %arg16: memref<8x32xf32, #tpu.memory_space<vmem>>) attributes {dimension_semantics = [#tpu.dimension_semantics<parallel>, #tpu.dimension_semantics<parallel>], iteration_bounds = array<i64: 2, 1>, scalar_prefetch = 0 : i64, scratch_operands = 1 : i64, tpu.core_type = #tpu.core_type<tc>, window_params = [{transform_indices = @transform_0, window_bounds = array<i64: 1, 8, 32>}, {pipeline_mode = #tpu.pipeline_mode<synchronous>, transform_indices = @transform_1, window_bounds = array<i64: 32, 32>}, {pipeline_mode = #tpu.pipeline_mode<synchronous>, transform_indices = @transform_2, window_bounds = array<i64: 1, 32>}, {pipeline_mode = #tpu.pipeline_mode<synchronous>, transform_indices = @transform_3, window_bounds = array<i64: 32, 32>}, {pipeline_mode = #tpu.pipeline_mode<synchronous>, transform_indices = @transform_4, window_bounds = array<i64: 1, 32>}, {pipeline_mode = #tpu.pipeline_mode<synchronous>, transform_indices = @transform_5, window_bounds = array<i64: 32, 32>}, {pipeline_mode = #tpu.pipeline_mode<synchronous>, transform_indices = @transform_6, window_bounds = array<i64: 1, 32>}, {pipeline_mode = #tpu.pipeline_mode<synchronous>, transform_indices = @transform_7, window_bounds = array<i64: 32, 32>}, {pipeline_mode = #tpu.pipeline_mode<synchronous>, transform_indices = @transform_8, window_bounds = array<i64: 1, 32>}, {pipeline_mode = #tpu.pipeline_mode<synchronous>, transform_indices = @transform_9, window_bounds = array<i64: 32, 64>}, {pipeline_mode = #tpu.pipeline_mode<synchronous>, transform_indices = @transform_10, window_bounds = array<i64: 1, 64>}, {pipeline_mode = #tpu.pipeline_mode<synchronous>, transform_indices = @transform_11, window_bounds = array<i64: 64, 32>}, {pipeline_mode = #tpu.pipeline_mode<synchronous>, transform_indices = @transform_12, window_bounds = array<i64: 1, 32>}, {transform_indices = @transform_13, window_bounds = array<i64: 1, 8, 32>}]} {
    %c0 = arith.constant 0 : index
    %c0_0 = arith.constant 0 : index
    %c0_1 = arith.constant 0 : index
    %0 = vector.load %arg2[%c0, %c0_0, %c0_1] : memref<1x8x32xbf16, #tpu.memory_space<vmem>>, vector<1x8x32xbf16>
    %1 = vector.shape_cast %0 : vector<1x8x32xbf16> to vector<8x32xbf16>
    %c8_i32 = arith.constant 8 : i32
    %2 = arith.muli %arg1, %c8_i32 : i32
    %3 = tpu.assume_multiple %2, 8 : i32
    %c0_2 = arith.constant 0 : index
    %4 = arith.index_cast %3 : i32 to index
    %c0_3 = arith.constant 0 : index
    %5 = vector.load %arg2[%c0_2, %4, %c0_3] : memref<1x8x32xbf16, #tpu.memory_space<vmem>>, vector<1x8x32xbf16>
    %6 = vector.shape_cast %5 : vector<1x8x32xbf16> to vector<8x32xbf16>
    %c0_4 = arith.constant 0 : index
    %c0_5 = arith.constant 0 : index
    %7 = vector.load %arg5[%c0_4, %c0_5] : memref<32x32xbf16, #tpu.memory_space<vmem>>, vector<32x32xbf16>
    %cst = arith.constant dense<0.000000e+00> : vector<8x32xf32>
    %8 = tpu.matmul %1, %7, %cst {dimension_numbers = #tpu.dot_dimension_numbers<[1], [0], [0], [1], [0, 0, 1, 1], [], []>} : vector<8x32xbf16>, vector<32x32xbf16>, vector<8x32xf32> -> vector<8x32xf32>
    %c0_6 = arith.constant 0 : index
    %c0_7 = arith.constant 0 : index
    %9 = vector.load %arg6[%c0_6, %c0_7] : memref<1x32xf32, #tpu.memory_space<vmem>>, vector<1x32xf32>
    %10 = vector.broadcast %9 : vector<1x32xf32> to vector<8x32xf32>
    %11 = arith.addf %8, %10 : vector<8x32xf32>
    %c0_8 = arith.constant 0 : index
    %c0_9 = arith.constant 0 : index
    %12 = vector.load %arg7[%c0_8, %c0_9] : memref<32x32xbf16, #tpu.memory_space<vmem>>, vector<32x32xbf16>
    %cst_10 = arith.constant dense<0.000000e+00> : vector<8x32xf32>
    %13 = tpu.matmul %1, %12, %cst_10 {dimension_numbers = #tpu.dot_dimension_numbers<[1], [0], [0], [1], [0, 0, 1, 1], [], []>} : vector<8x32xbf16>, vector<32x32xbf16>, vector<8x32xf32> -> vector<8x32xf32>
    %c0_11 = arith.constant 0 : index
    %c0_12 = arith.constant 0 : index
    %14 = vector.load %arg8[%c0_11, %c0_12] : memref<1x32xf32, #tpu.memory_space<vmem>>, vector<1x32xf32>
    %15 = vector.broadcast %14 : vector<1x32xf32> to vector<8x32xf32>
    %16 = arith.addf %13, %15 : vector<8x32xf32>
    %c0_13 = arith.constant 0 : index
    %c0_14 = arith.constant 0 : index
    %17 = vector.load %arg3[%c0_13, %c0_14] : memref<32x32xbf16, #tpu.memory_space<vmem>>, vector<32x32xbf16>
    %cst_15 = arith.constant dense<0.000000e+00> : vector<8x32xf32>
    %18 = tpu.matmul %6, %17, %cst_15 {dimension_numbers = #tpu.dot_dimension_numbers<[1], [0], [0], [1], [0, 0, 1, 1], [], []>} : vector<8x32xbf16>, vector<32x32xbf16>, vector<8x32xf32> -> vector<8x32xf32>
    %c0_16 = arith.constant 0 : index
    %c0_17 = arith.constant 0 : index
    %19 = vector.load %arg4[%c0_16, %c0_17] : memref<1x32xf32, #tpu.memory_space<vmem>>, vector<1x32xf32>
    %20 = vector.broadcast %19 : vector<1x32xf32> to vector<8x32xf32>
    %21 = arith.addf %18, %20 : vector<8x32xf32>
    %cst_18 = arith.constant 0.353553385 : f32
    %22 = vector.broadcast %cst_18 : f32 to vector<8x32xf32>
    %23 = arith.mulf %21, %22 : vector<8x32xf32>
    %24 = arith.truncf %23 : vector<8x32xf32> to vector<8x32xbf16>
    %25 = arith.truncf %11 : vector<8x32xf32> to vector<8x32xbf16>
    %26 = arith.truncf %16 : vector<8x32xf32> to vector<8x32xbf16>
    %27 = vector.extract_strided_slice %24 {offsets = [0, 0], sizes = [8, 8], strides = [1, 1]} : vector<8x32xbf16> to vector<8x8xbf16>
    %28 = vector.extract_strided_slice %25 {offsets = [0, 0], sizes = [8, 8], strides = [1, 1]} : vector<8x32xbf16> to vector<8x8xbf16>
    %29 = vector.extract_strided_slice %26 {offsets = [0, 0], sizes = [8, 8], strides = [1, 1]} : vector<8x32xbf16> to vector<8x8xbf16>
    %cst_19 = arith.constant dense<0.000000e+00> : vector<8x8xf32>
    %30 = tpu.matmul %27, %28, %cst_19 {dimension_numbers = #tpu.dot_dimension_numbers<[1], [1], [0], [0], [0, 0, 1, 0], [], []>} : vector<8x8xbf16>, vector<8x8xbf16>, vector<8x8xf32> -> vector<8x8xf32>
    %cst_20 = arith.constant dense<0xFF800000> : vector<8xf32>
    %31 = vector.multi_reduction <maximumf>, %30, %cst_20 [1] : vector<8x8xf32> to vector<8xf32>
    %32 = vector.shape_cast %31 : vector<8xf32> to vector<8x1xf32>
    %33 = vector.broadcast %32 : vector<8x1xf32> to vector<8x8xf32>
    %34 = arith.subf %30, %33 : vector<8x8xf32>
    %35 = math.exp %34 : vector<8x8xf32>
    %cst_21 = arith.constant dense<0.000000e+00> : vector<8xf32>
    %36 = vector.multi_reduction <add>, %35, %cst_21 [1] : vector<8x8xf32> to vector<8xf32>
    %37 = vector.shape_cast %36 : vector<8xf32> to vector<8x1xf32>
    %38 = tpu.reciprocal %37 {approx = true} : vector<8x1xf32> -> vector<8x1xf32>
    %39 = vector.broadcast %38 : vector<8x1xf32> to vector<8x8xf32>
    %40 = arith.mulf %35, %39 : vector<8x8xf32>
    %41 = arith.truncf %40 : vector<8x8xf32> to vector<8x8xbf16>
    %cst_22 = arith.constant dense<0.000000e+00> : vector<8x8xf32>
    %42 = tpu.matmul %41, %29, %cst_22 {dimension_numbers = #tpu.dot_dimension_numbers<[1], [0], [0], [1], [0, 0, 1, 1], [], []>} : vector<8x8xbf16>, vector<8x8xbf16>, vector<8x8xf32> -> vector<8x8xf32>
    %c0_23 = arith.constant 0 : index
    %c0_24 = arith.constant 0 : index
    %43 = vector.load %arg16[%c0_23, %c0_24] : memref<8x32xf32, #tpu.memory_space<vmem>>, vector<8x8xf32>
    tpu.vector_store %arg16[%c0_23, %c0_24], %42 {strides = array<i32>} : memref<8x32xf32, #tpu.memory_space<vmem>>, vector<8x8xf32>,
    %44 = vector.extract_strided_slice %24 {offsets = [0, 8], sizes = [8, 8], strides = [1, 1]} : vector<8x32xbf16> to vector<8x8xbf16>
    %45 = vector.extract_strided_slice %25 {offsets = [0, 8], sizes = [8, 8], strides = [1, 1]} : vector<8x32xbf16> to vector<8x8xbf16>
    %46 = vector.extract_strided_slice %26 {offsets = [0, 8], sizes = [8, 8], strides = [1, 1]} : vector<8x32xbf16> to vector<8x8xbf16>
    %cst_25 = arith.constant dense<0.000000e+00> : vector<8x8xf32>
    %47 = tpu.matmul %44, %45, %cst_25 {dimension_numbers = #tpu.dot_dimension_numbers<[1], [1], [0], [0], [0, 0, 1, 0], [], []>} : vector<8x8xbf16>, vector<8x8xbf16>, vector<8x8xf32> -> vector<8x8xf32>
    %cst_26 = arith.constant dense<0xFF800000> : vector<8xf32>
    %48 = vector.multi_reduction <maximumf>, %47, %cst_26 [1] : vector<8x8xf32> to vector<8xf32>
    %49 = vector.shape_cast %48 : vector<8xf32> to vector<8x1xf32>
    %50 = vector.broadcast %49 : vector<8x1xf32> to vector<8x8xf32>
    %51 = arith.subf %47, %50 : vector<8x8xf32>
    %52 = math.exp %51 : vector<8x8xf32>
    %cst_27 = arith.constant dense<0.000000e+00> : vector<8xf32>
    %53 = vector.multi_reduction <add>, %52, %cst_27 [1] : vector<8x8xf32> to vector<8xf32>
    %54 = vector.shape_cast %53 : vector<8xf32> to vector<8x1xf32>
    %55 = tpu.reciprocal %54 {approx = true} : vector<8x1xf32> -> vector<8x1xf32>
    %56 = vector.broadcast %55 : vector<8x1xf32> to vector<8x8xf32>
    %57 = arith.mulf %52, %56 : vector<8x8xf32>
    %58 = arith.truncf %57 : vector<8x8xf32> to vector<8x8xbf16>
    %cst_28 = arith.constant dense<0.000000e+00> : vector<8x8xf32>
    %59 = tpu.matmul %58, %46, %cst_28 {dimension_numbers = #tpu.dot_dimension_numbers<[1], [0], [0], [1], [0, 0, 1, 1], [], []>} : vector<8x8xbf16>, vector<8x8xbf16>, vector<8x8xf32> -> vector<8x8xf32>
    %c0_29 = arith.constant 0 : index
    %c8 = arith.constant 8 : index
    %60 = vector.load %arg16[%c0_29, %c8] : memref<8x32xf32, #tpu.memory_space<vmem>>, vector<8x8xf32>
    tpu.vector_store %arg16[%c0_29, %c8], %59 {strides = array<i32>} : memref<8x32xf32, #tpu.memory_space<vmem>>, vector<8x8xf32>,
    %61 = vector.extract_strided_slice %24 {offsets = [0, 16], sizes = [8, 8], strides = [1, 1]} : vector<8x32xbf16> to vector<8x8xbf16>
    %62 = vector.extract_strided_slice %25 {offsets = [0, 16], sizes = [8, 8], strides = [1, 1]} : vector<8x32xbf16> to vector<8x8xbf16>
    %63 = vector.extract_strided_slice %26 {offsets = [0, 16], sizes = [8, 8], strides = [1, 1]} : vector<8x32xbf16> to vector<8x8xbf16>
    %cst_30 = arith.constant dense<0.000000e+00> : vector<8x8xf32>
    %64 = tpu.matmul %61, %62, %cst_30 {dimension_numbers = #tpu.dot_dimension_numbers<[1], [1], [0], [0], [0, 0, 1, 0], [], []>} : vector<8x8xbf16>, vector<8x8xbf16>, vector<8x8xf32> -> vector<8x8xf32>
    %cst_31 = arith.constant dense<0xFF800000> : vector<8xf32>
    %65 = vector.multi_reduction <maximumf>, %64, %cst_31 [1] : vector<8x8xf32> to vector<8xf32>
    %66 = vector.shape_cast %65 : vector<8xf32> to vector<8x1xf32>
    %67 = vector.broadcast %66 : vector<8x1xf32> to vector<8x8xf32>
    %68 = arith.subf %64, %67 : vector<8x8xf32>
    %69 = math.exp %68 : vector<8x8xf32>
    %cst_32 = arith.constant dense<0.000000e+00> : vector<8xf32>
    %70 = vector.multi_reduction <add>, %69, %cst_32 [1] : vector<8x8xf32> to vector<8xf32>
    %71 = vector.shape_cast %70 : vector<8xf32> to vector<8x1xf32>
    %72 = tpu.reciprocal %71 {approx = true} : vector<8x1xf32> -> vector<8x1xf32>
    %73 = vector.broadcast %72 : vector<8x1xf32> to vector<8x8xf32>
    %74 = arith.mulf %69, %73 : vector<8x8xf32>
    %75 = arith.truncf %74 : vector<8x8xf32> to vector<8x8xbf16>
    %cst_33 = arith.constant dense<0.000000e+00> : vector<8x8xf32>
    %76 = tpu.matmul %75, %63, %cst_33 {dimension_numbers = #tpu.dot_dimension_numbers<[1], [0], [0], [1], [0, 0, 1, 1], [], []>} : vector<8x8xbf16>, vector<8x8xbf16>, vector<8x8xf32> -> vector<8x8xf32>
    %c0_34 = arith.constant 0 : index
    %c16 = arith.constant 16 : index
    %77 = vector.load %arg16[%c0_34, %c16] : memref<8x32xf32, #tpu.memory_space<vmem>>, vector<8x8xf32>
    tpu.vector_store %arg16[%c0_34, %c16], %76 {strides = array<i32>} : memref<8x32xf32, #tpu.memory_space<vmem>>, vector<8x8xf32>,
    %78 = vector.extract_strided_slice %24 {offsets = [0, 24], sizes = [8, 8], strides = [1, 1]} : vector<8x32xbf16> to vector<8x8xbf16>
    %79 = vector.extract_strided_slice %25 {offsets = [0, 24], sizes = [8, 8], strides = [1, 1]} : vector<8x32xbf16> to vector<8x8xbf16>
    %80 = vector.extract_strided_slice %26 {offsets = [0, 24], sizes = [8, 8], strides = [1, 1]} : vector<8x32xbf16> to vector<8x8xbf16>
    %cst_35 = arith.constant dense<0.000000e+00> : vector<8x8xf32>
    %81 = tpu.matmul %78, %79, %cst_35 {dimension_numbers = #tpu.dot_dimension_numbers<[1], [1], [0], [0], [0, 0, 1, 0], [], []>} : vector<8x8xbf16>, vector<8x8xbf16>, vector<8x8xf32> -> vector<8x8xf32>
    %cst_36 = arith.constant dense<0xFF800000> : vector<8xf32>
    %82 = vector.multi_reduction <maximumf>, %81, %cst_36 [1] : vector<8x8xf32> to vector<8xf32>
    %83 = vector.shape_cast %82 : vector<8xf32> to vector<8x1xf32>
    %84 = vector.broadcast %83 : vector<8x1xf32> to vector<8x8xf32>
    %85 = arith.subf %81, %84 : vector<8x8xf32>
    %86 = math.exp %85 : vector<8x8xf32>
    %cst_37 = arith.constant dense<0.000000e+00> : vector<8xf32>
    %87 = vector.multi_reduction <add>, %86, %cst_37 [1] : vector<8x8xf32> to vector<8xf32>
    %88 = vector.shape_cast %87 : vector<8xf32> to vector<8x1xf32>
    %89 = tpu.reciprocal %88 {approx = true} : vector<8x1xf32> -> vector<8x1xf32>
    %90 = vector.broadcast %89 : vector<8x1xf32> to vector<8x8xf32>
    %91 = arith.mulf %86, %90 : vector<8x8xf32>
    %92 = arith.truncf %91 : vector<8x8xf32> to vector<8x8xbf16>
    %cst_38 = arith.constant dense<0.000000e+00> : vector<8x8xf32>
    %93 = tpu.matmul %92, %80, %cst_38 {dimension_numbers = #tpu.dot_dimension_numbers<[1], [0], [0], [1], [0, 0, 1, 1], [], []>} : vector<8x8xbf16>, vector<8x8xbf16>, vector<8x8xf32> -> vector<8x8xf32>
    %c0_39 = arith.constant 0 : index
    %c24 = arith.constant 24 : index
    %94 = vector.load %arg16[%c0_39, %c24] : memref<8x32xf32, #tpu.memory_space<vmem>>, vector<8x8xf32>
    tpu.vector_store %arg16[%c0_39, %c24], %93 {strides = array<i32>} : memref<8x32xf32, #tpu.memory_space<vmem>>, vector<8x8xf32>,
    %c0_40 = arith.constant 0 : index
    %c0_41 = arith.constant 0 : index
    %95 = vector.load %arg16[%c0_40, %c0_41] : memref<8x32xf32, #tpu.memory_space<vmem>>, vector<8x32xf32>
    %96 = arith.truncf %95 : vector<8x32xf32> to vector<8x32xbf16>
    %c0_42 = arith.constant 0 : index
    %c0_43 = arith.constant 0 : index
    %97 = vector.load %arg9[%c0_42, %c0_43] : memref<32x32xbf16, #tpu.memory_space<vmem>>, vector<32x32xbf16>
    %cst_44 = arith.constant dense<0.000000e+00> : vector<8x32xf32>
    %98 = tpu.matmul %96, %97, %cst_44 {dimension_numbers = #tpu.dot_dimension_numbers<[1], [0], [0], [1], [0, 0, 1, 1], [], []>} : vector<8x32xbf16>, vector<32x32xbf16>, vector<8x32xf32> -> vector<8x32xf32>
    %c0_45 = arith.constant 0 : index
    %c0_46 = arith.constant 0 : index
    %99 = vector.load %arg10[%c0_45, %c0_46] : memref<1x32xf32, #tpu.memory_space<vmem>>, vector<1x32xf32>
    %100 = vector.broadcast %99 : vector<1x32xf32> to vector<8x32xf32>
    %101 = arith.addf %98, %100 : vector<8x32xf32>
    %102 = arith.truncf %101 : vector<8x32xf32> to vector<8x32xbf16>
    %c0_47 = arith.constant 0 : index
    %c0_48 = arith.constant 0 : index
    %103 = vector.load %arg11[%c0_47, %c0_48] : memref<32x64xbf16, #tpu.memory_space<vmem>>, vector<32x64xbf16>
    %cst_49 = arith.constant dense<0.000000e+00> : vector<8x64xf32>
    %104 = tpu.matmul %102, %103, %cst_49 {dimension_numbers = #tpu.dot_dimension_numbers<[1], [0], [0], [1], [0, 0, 1, 1], [], []>} : vector<8x32xbf16>, vector<32x64xbf16>, vector<8x64xf32> -> vector<8x64xf32>
    %c0_50 = arith.constant 0 : index
    %c0_51 = arith.constant 0 : index
    %105 = vector.load %arg12[%c0_50, %c0_51] : memref<1x64xf32, #tpu.memory_space<vmem>>, vector<1x64xf32>
    %106 = vector.broadcast %105 : vector<1x64xf32> to vector<8x64xf32>
    %107 = arith.addf %104, %106 : vector<8x64xf32>
    %cst_52 = arith.constant 0.000000e+00 : f32
    %108 = vector.broadcast %cst_52 : f32 to vector<8x64xf32>
    %109 = arith.maximumf %107, %108 : vector<8x64xf32>
    %110 = arith.truncf %109 : vector<8x64xf32> to vector<8x64xbf16>
    %c0_53 = arith.constant 0 : index
    %c0_54 = arith.constant 0 : index
    %111 = vector.load %arg13[%c0_53, %c0_54] : memref<64x32xbf16, #tpu.memory_space<vmem>>, vector<64x32xbf16>
    %cst_55 = arith.constant dense<0.000000e+00> : vector<8x32xf32>
    %112 = tpu.matmul %110, %111, %cst_55 {dimension_numbers = #tpu.dot_dimension_numbers<[1], [0], [0], [1], [0, 0, 1, 1], [], []>} : vector<8x64xbf16>, vector<64x32xbf16>, vector<8x32xf32> -> vector<8x32xf32>
    %c0_56 = arith.constant 0 : index
    %c0_57 = arith.constant 0 : index
    %113 = vector.load %arg14[%c0_56, %c0_57] : memref<1x32xf32, #tpu.memory_space<vmem>>, vector<1x32xf32>
    %114 = vector.broadcast %113 : vector<1x32xf32> to vector<8x32xf32>
    %115 = arith.addf %112, %114 : vector<8x32xf32>
    %c0_58 = arith.constant 0 : index
    %c0_59 = arith.constant 0 : index
    %c0_60 = arith.constant 0 : index
    %116 = vector.load %arg15[%c0_58, %c0_59, %c0_60] : memref<1x8x32xf32, #tpu.memory_space<vmem>>, vector<1x8x32xf32>
    %117 = vector.shape_cast %116 : vector<1x8x32xf32> to vector<8x32xf32>
    %118 = vector.shape_cast %115 : vector<8x32xf32> to vector<1x8x32xf32>
    tpu.vector_store %arg15[%c0_58, %c0_59, %c0_60], %118 {strides = array<i32>} : memref<1x8x32xf32, #tpu.memory_space<vmem>>, vector<1x8x32xf32>,
    return
  }
  func.func @transform_0(%arg0: i32, %arg1: i32) -> (i32, i32, i32) {
    %c0_i32 = arith.constant 0 : i32
    %c0_i32_0 = arith.constant 0 : i32
    %c0_i32_1 = arith.constant 0 : i32
    return %arg0, %c0_i32, %c0_i32_0 : i32, i32, i32
  }
  func.func @transform_1(%arg0: i32, %arg1: i32) -> (i32, i32) {
    %c0_i32 = arith.constant 0 : i32
    %c0_i32_0 = arith.constant 0 : i32
    %c0_i32_1 = arith.constant 0 : i32
    return %c0_i32, %c0_i32_0 : i32, i32
  }
  func.func @transform_2(%arg0: i32, %arg1: i32) -> (i32, i32) {
    %c0_i32 = arith.constant 0 : i32
    %c0_i32_0 = arith.constant 0 : i32
    %c0_i32_1 = arith.constant 0 : i32
    return %c0_i32, %c0_i32_0 : i32, i32
  }
  func.func @transform_3(%arg0: i32, %arg1: i32) -> (i32, i32) {
    %c0_i32 = arith.constant 0 : i32
    %c0_i32_0 = arith.constant 0 : i32
    %c0_i32_1 = arith.constant 0 : i32
    return %c0_i32, %c0_i32_0 : i32, i32
  }
  func.func @transform_4(%arg0: i32, %arg1: i32) -> (i32, i32) {
    %c0_i32 = arith.constant 0 : i32
    %c0_i32_0 = arith.constant 0 : i32
    %c0_i32_1 = arith.constant 0 : i32
    return %c0_i32, %c0_i32_0 : i32, i32
  }
  func.func @transform_5(%arg0: i32, %arg1: i32) -> (i32, i32) {
    %c0_i32 = arith.constant 0 : i32
    %c0_i32_0 = arith.constant 0 : i32
    %c0_i32_1 = arith.constant 0 : i32
    return %c0_i32, %c0_i32_0 : i32, i32
  }
  func.func @transform_6(%arg0: i32, %arg1: i32) -> (i32, i32) {
    %c0_i32 = arith.constant 0 : i32
    %c0_i32_0 = arith.constant 0 : i32
    %c0_i32_1 = arith.constant 0 : i32
    return %c0_i32, %c0_i32_0 : i32, i32
  }
  func.func @transform_7(%arg0: i32, %arg1: i32) -> (i32, i32) {
    %c0_i32 = arith.constant 0 : i32
    %c0_i32_0 = arith.constant 0 : i32
    %c0_i32_1 = arith.constant 0 : i32
    return %c0_i32, %c0_i32_0 : i32, i32
  }
  func.func @transform_8(%arg0: i32, %arg1: i32) -> (i32, i32) {
    %c0_i32 = arith.constant 0 : i32
    %c0_i32_0 = arith.constant 0 : i32
    %c0_i32_1 = arith.constant 0 : i32
    return %c0_i32, %c0_i32_0 : i32, i32
  }
  func.func @transform_9(%arg0: i32, %arg1: i32) -> (i32, i32) {
    %c0_i32 = arith.constant 0 : i32
    %c0_i32_0 = arith.constant 0 : i32
    %c0_i32_1 = arith.constant 0 : i32
    return %c0_i32, %c0_i32_0 : i32, i32
  }
  func.func @transform_10(%arg0: i32, %arg1: i32) -> (i32, i32) {
    %c0_i32 = arith.constant 0 : i32
    %c0_i32_0 = arith.constant 0 : i32
    %c0_i32_1 = arith.constant 0 : i32
    return %c0_i32, %c0_i32_0 : i32, i32
  }
  func.func @transform_11(%arg0: i32, %arg1: i32) -> (i32, i32) {
    %c0_i32 = arith.constant 0 : i32
    %c0_i32_0 = arith.constant 0 : i32
    %c0_i32_1 = arith.constant 0 : i32
    return %c0_i32, %c0_i32_0 : i32, i32
  }
  func.func @transform_12(%arg0: i32, %arg1: i32) -> (i32, i32) {
    %c0_i32 = arith.constant 0 : i32
    %c0_i32_0 = arith.constant 0 : i32
    %c0_i32_1 = arith.constant 0 : i32
    return %c0_i32, %c0_i32_0 : i32, i32
  }
  func.func @transform_13(%arg0: i32, %arg1: i32) -> (i32, i32, i32) {
    %c0_i32 = arith.constant 0 : i32
    %c0_i32_0 = arith.constant 0 : i32
    return %arg0, %arg1, %c0_i32 : i32, i32, i32
  }
}

</mosaic_0001>

<llo_original>
// kernel: tpu_custom_call.1
$region0: #{tpu_custom_call.1}
  #allocation0 [shape = 'u32[]', space=smem, size = 0x4, offset = 0x4, fixed_abs, tag = 'smem constant byte address 0x4 - core index']
  #allocation1 [shape = 'u32[144,128]{1,0:T(1,128)}', space=vmem, size = 0x12000, scoped, tag = 'internal scratch']
  #allocation2 [shape = 'f32[8,32]{1,0:T(8,128)}', space=vmem, size = 0x1000, scoped, tag = 'scratch operand']
  %s0 = inlined_call_operand.hbm [shape: bf16[2,8,32], index: 0, kind: input, shape index: {}]
  %s1 = inlined_call_operand.vmem [shape: bf16[32,32], index: 1, kind: input, shape index: {}]
  %s2 = inlined_call_operand.vmem [shape: f32[1,32], index: 2, kind: input, shape index: {}]
  %s3 = inlined_call_operand.vmem [shape: bf16[32,32], index: 3, kind: input, shape index: {}]
  %s4 = inlined_call_operand.vmem [shape: f32[1,32], index: 4, kind: input, shape index: {}]
  %s5 = inlined_call_operand.vmem [shape: bf16[32,32], index: 5, kind: input, shape index: {}]
  %s6 = inlined_call_operand.hbm [shape: f32[1,32], index: 6, kind: input, shape index: {}]
  %s7 = inlined_call_operand.hbm [shape: bf16[32,32], index: 7, kind: input, shape index: {}]
  %s8 = inlined_call_operand.hbm [shape: f32[1,32], index: 8, kind: input, shape index: {}]
  %s9 = inlined_call_operand.vmem [shape: bf16[32,64], index: 9, kind: input, shape index: {}]
  %s10 = inlined_call_operand.vmem [shape: f32[1,64], index: 10, kind: input, shape index: {}]
  %s11 = inlined_call_operand.vmem [shape: bf16[64,32], index: 11, kind: input, shape index: {}]
  %s12 = inlined_call_operand.vmem [shape: f32[1,32], index: 12, kind: input, shape index: {}]
  %s13 = inlined_call_operand.hbm [shape: f32[2,8,32], index: 13, kind: output, shape index: {}]
  %s14 = sld [smem:[#allocation0]]
  $region101: #{tpu_custom_call.1} parent=0
    _
  %s16 = ssub.s32 1, %s14
  %s17 = scalar_select 0, %s16, %s14
  $region1: #{tpu_custom_call.1} parent=0
    #allocation3 [shape = 'u8[4096]{0}', space=vmem, size = 0x1000, scoped, tag = 'input window, operand 0']
    #allocation4 [shape = 's32[2]{0}', space=sflag, size = 0x8, scoped, tag = 'scoped memory for tpu_custom_call.1']
    #allocation5 [shape = 's32[2]{0}', space=sflag, size = 0x8, scoped, tag = 'scoped memory for tpu_custom_call.1']
    #allocation6 [shape = 'u8[512]{0}', space=vmem, size = 0x400, scoped, tag = 'input window, operand 6, single buffered']
    #allocation7 [shape = 's32[1]{0}', space=sflag, size = 0x4, scoped, tag = 'scoped memory for tpu_custom_call.1']
    #allocation8 [shape = 'u8[8192]{0}', space=vmem, size = 0x2000, scoped, tag = 'input window, operand 7, single buffered']
    #allocation9 [shape = 'u8[512]{0}', space=vmem, size = 0x400, scoped, tag = 'input window, operand 8, single buffered']
    #allocation10 [shape = 's32[1]{0}', space=sflag, size = 0x4, scoped, tag = 'scoped memory for tpu_custom_call.1']
    #allocation11 [shape = 'u8[8192]{0}', space=vmem, size = 0x2000, scoped, tag = 'output window, operand 0']
    %18 = vsyncpa [#allocation4], 0
    %s19 = scalar_lea.sflag [#allocation4], 1
    %20 = vsyncpa %s19, 0
    %21 = vsyncpa [#allocation7], 0
    %22 = vsyncpa [#allocation10], 0
    %23 = vsyncpa [#allocation5], 0
    %s24 = scalar_lea.sflag [#allocation5], 1
    %25 = vsyncpa %s24, 0
    loop: start=0, step=1, limit=4
    $region2: #{tpu_custom_call.1} parent=1 // loop_pre_header
      _
    $region3: #{tpu_custom_call.1} parent=1 // loop_header
      %s27 = sphi 0, %s31
      %p28 = scmp.ge.s32.totalorder %s27, 4
      %s34 = sphi 0, %s46
      %s35 = sphi 0, %s42
      %s36 = sphi 0, %s34
      %s37 = sphi 0, %s35
      %s38 = sphi 0, %s36
      %s39 = sphi 0, %s37
      %s49 = sphi 0, %s51
      %s52 = sphi 0, %s49
      %s53 = sphi 0, %s52
      %s69 = sphi 0, %s53
      %s73 = sphi 0, %s73
      %s75 = sphi 0, %s73
      %s76 = sphi 0, %s75
      %s90 = sphi 0, %s76
      %s94 = sphi 0, %s94
      %s96 = sphi 0, %s94
      %s97 = sphi 0, %s96
      %s111 = sphi 0, %s97
      %s115 = sphi 0, %s115
      %s117 = sphi 0, %s115
      %s118 = sphi 0, %s117
      %s132 = sphi 0, %s118
      %s136 = sphi 0, %s136
      %s138 = sphi 0, %s136
      %s139 = sphi 0, %s138
      %s153 = sphi 0, %s139
      %s157 = sphi 0, %s157
      %s159 = sphi 0, %s157
      %s160 = sphi 0, %s159
      %s174 = sphi 0, %s160
      %s178 = sphi 0, %s178
      %s180 = sphi 0, %s178
      %s181 = sphi 0, %s180
      %s195 = sphi 0, %s181
      %s199 = sphi 0, %s199
      %s201 = sphi 0, %s199
      %s202 = sphi 0, %s201
      %s216 = sphi 0, %s202
      %s220 = sphi 0, %s220
      %s222 = sphi 0, %s220
      %s223 = sphi 0, %s222
      %s237 = sphi 0, %s223
      %s241 = sphi 0, %s241
      %s243 = sphi 0, %s241
      %s244 = sphi 0, %s243
      %s258 = sphi 0, %s244
      %s262 = sphi 0, %s262
      %s264 = sphi 0, %s262
      %s265 = sphi 0, %s264
      %s279 = sphi 0, %s265
      %s283 = sphi 0, %s283
      %s285 = sphi 0, %s283
      %s286 = sphi 0, %s285
      %s300 = sphi 0, %s286
      %s304 = sphi 0, %s304
      %s306 = sphi 0, %s304
      %s307 = sphi 0, %s306
      %s321 = sphi 0, %s307
      %s329 = sphi 0, %s331
      %s332 = sphi 0, %s329
      %s333 = sphi 0, %s332
      %s349 = sphi 0, %s333
    $region4: #{tpu_custom_call.1} parent=1 // loop_header_branch
      %30 = sbr.rel (%p28) target = $region8
    $region5: #{tpu_custom_call.1} parent=1 // loop_body
      %s32 = ssub.s32 %s27, 1
      %s33 = ssub.s32 %s27, 2
      %s40 = sadd.s32 1, %s35
      %p41 = scmp.ge.s32.totalorder %s40, 1
      %s42 = scalar_select %p41, 0, %s40
      %s43 = sadd.s32 1, %s34
      %s44 = scalar_select %p41, %s43, %s34
      %p45 = scmp.ge.s32.totalorder %s44, 2
      %s46 = scalar_select %p45, 0, %s44
      %s47 = ssub.s32 %s34, %s46
      %p48 = scmp.eq.s32.totalorder %s47, 0
      %s50 = sadd.s32 %s49, 1
      %s51 = scalar_select %p48, %s49, %s50
      %p54 = pneg %p48
      %p55 = scmp.eq.s32.totalorder %s27, 1
      %p56 = por %p54, %p55
      %p57 = scmp.ne.s32.totalorder %s49, %s52
      %p58 = scmp.eq.s32.totalorder %s27, 0
      %p59 = por %p57, %p58
      %p60 = scmp.ne.s32.totalorder %s49, %s52
      %p61 = scmp.eq.s32.totalorder %s32, 1
      %p62 = por %p60, %p61
      %p63 = scmp.ne.s32.totalorder %s52, %s53
      %p64 = scmp.eq.s32.totalorder %s32, 0
      %p65 = por %p63, %p64
      %p66 = scmp.ne.s32.totalorder %s52, %s53
      %p67 = scmp.eq.s32.totalorder %s33, 1
      %p68 = por %p66, %p67
      %p70 = scmp.ne.s32.totalorder %s53, %s69
      %p71 = scmp.eq.s32.totalorder %s33, 0
      %p72 = por %p70, %p71
      %s74 = sadd.s32 %s73, 1
      %p77 = scmp.eq.s32.totalorder %s27, 1
      %p78 = scmp.ne.s32.totalorder %s73, %s75
      %p79 = scmp.eq.s32.totalorder %s27, 0
      %p80 = por %p78, %p79
      %p81 = scmp.ne.s32.totalorder %s73, %s75
      %p82 = scmp.eq.s32.totalorder %s32, 1
      %p83 = por %p81, %p82
      %p84 = scmp.ne.s32.totalorder %s75, %s76
      %p85 = scmp.eq.s32.totalorder %s32, 0
      %p86 = por %p84, %p85
      %p87 = scmp.ne.s32.totalorder %s75, %s76
      %p88 = scmp.eq.s32.totalorder %s33, 1
      %p89 = por %p87, %p88
      %p91 = scmp.ne.s32.totalorder %s76, %s90
      %p92 = scmp.eq.s32.totalorder %s33, 0
      %p93 = por %p91, %p92
      %s95 = sadd.s32 %s94, 1
      %p98 = scmp.eq.s32.totalorder %s27, 1
      %p99 = scmp.ne.s32.totalorder %s94, %s96
      %p100 = scmp.eq.s32.totalorder %s27, 0
      %p101 = por %p99, %p100
      %p102 = scmp.ne.s32.totalorder %s94, %s96
      %p103 = scmp.eq.s32.totalorder %s32, 1
      %p104 = por %p102, %p103
      %p105 = scmp.ne.s32.totalorder %s96, %s97
      %p106 = scmp.eq.s32.totalorder %s32, 0
      %p107 = por %p105, %p106
      %p108 = scmp.ne.s32.totalorder %s96, %s97
      %p109 = scmp.eq.s32.totalorder %s33, 1
      %p110 = por %p108, %p109
      %p112 = scmp.ne.s32.totalorder %s97, %s111
      %p113 = scmp.eq.s32.totalorder %s33, 0
      %p114 = por %p112, %p113
      %s116 = sadd.s32 %s115, 1
      %p119 = scmp.eq.s32.totalorder %s27, 1
      %p120 = scmp.ne.s32.totalorder %s115, %s117
      %p121 = scmp.eq.s32.totalorder %s27, 0
      %p122 = por %p120, %p121
      %p123 = scmp.ne.s32.totalorder %s115, %s117
      %p124 = scmp.eq.s32.totalorder %s32, 1
      %p125 = por %p123, %p124
      %p126 = scmp.ne.s32.totalorder %s117, %s118
      %p127 = scmp.eq.s32.totalorder %s32, 0
      %p128 = por %p126, %p127
      %p129 = scmp.ne.s32.totalorder %s117, %s118
      %p130 = scmp.eq.s32.totalorder %s33, 1
      %p131 = por %p129, %p130
      %p133 = scmp.ne.s32.totalorder %s118, %s132
      %p134 = scmp.eq.s32.totalorder %s33, 0
      %p135 = por %p133, %p134
      %s137 = sadd.s32 %s136, 1
      %p140 = scmp.eq.s32.totalorder %s27, 1
      %p141 = scmp.ne.s32.totalorder %s136, %s138
      %p142 = scmp.eq.s32.totalorder %s27, 0
      %p143 = por %p141, %p142
      %p144 = scmp.ne.s32.totalorder %s136, %s138
      %p145 = scmp.eq.s32.totalorder %s32, 1
      %p146 = por %p144, %p145
      %p147 = scmp.ne.s32.totalorder %s138, %s139
      %p148 = scmp.eq.s32.totalorder %s32, 0
      %p149 = por %p147, %p148
      %p150 = scmp.ne.s32.totalorder %s138, %s139
      %p151 = scmp.eq.s32.totalorder %s33, 1
      %p152 = por %p150, %p151
      %p154 = scmp.ne.s32.totalorder %s139, %s153
      %p155 = scmp.eq.s32.totalorder %s33, 0
      %p156 = por %p154, %p155
      %s158 = sadd.s32 %s157, 1
      %p161 = scmp.eq.s32.totalorder %s27, 1
      %p162 = scmp.ne.s32.totalorder %s157, %s159
      %p163 = scmp.eq.s32.totalorder %s27, 0
      %p164 = por %p162, %p163
      %p165 = scmp.ne.s32.totalorder %s157, %s159
      %p166 = scmp.eq.s32.totalorder %s32, 1
      %p167 = por %p165, %p166
      %p168 = scmp.ne.s32.totalorder %s159, %s160
      %p169 = scmp.eq.s32.totalorder %s32, 0
      %p170 = por %p168, %p169
      %p171 = scmp.ne.s32.totalorder %s159, %s160
      %p172 = scmp.eq.s32.totalorder %s33, 1
      %p173 = por %p171, %p172
      %p175 = scmp.ne.s32.totalorder %s160, %s174
      %p176 = scmp.eq.s32.totalorder %s33, 0
      %p177 = por %p175, %p176
      %s179 = sadd.s32 %s178, 1
      %p182 = scmp.eq.s32.totalorder %s27, 1
      %p183 = scmp.ne.s32.totalorder %s178, %s180
      %p184 = scmp.eq.s32.totalorder %s27, 0
      %p185 = por %p183, %p184
      %p186 = scmp.ne.s32.totalorder %s178, %s180
      %p187 = scmp.eq.s32.totalorder %s32, 1
      %p188 = por %p186, %p187
      %p189 = scmp.ne.s32.totalorder %s180, %s181
      %p190 = scmp.eq.s32.totalorder %s32, 0
      %p191 = por %p189, %p190
      %p192 = scmp.ne.s32.totalorder %s180, %s181
      %p193 = scmp.eq.s32.totalorder %s33, 1
      %p194 = por %p192, %p193
      %p196 = scmp.ne.s32.totalorder %s181, %s195
      %p197 = scmp.eq.s32.totalorder %s33, 0
      %p198 = por %p196, %p197
      %s200 = sadd.s32 %s199, 1
      %p203 = scmp.eq.s32.totalorder %s27, 1
      %p204 = scmp.ne.s32.totalorder %s199, %s201
      %p205 = scmp.eq.s32.totalorder %s27, 0
      %p206 = por %p204, %p205
      %p207 = scmp.ne.s32.totalorder %s199, %s201
      %p208 = scmp.eq.s32.totalorder %s32, 1
      %p209 = por %p207, %p208
      %p210 = scmp.ne.s32.totalorder %s201, %s202
      %p211 = scmp.eq.s32.totalorder %s32, 0
      %p212 = por %p210, %p211
      %p213 = scmp.ne.s32.totalorder %s201, %s202
      %p214 = scmp.eq.s32.totalorder %s33, 1
      %p215 = por %p213, %p214
      %p217 = scmp.ne.s32.totalorder %s202, %s216
      %p218 = scmp.eq.s32.totalorder %s33, 0
      %p219 = por %p217, %p218
      %s221 = sadd.s32 %s220, 1
      %p224 = scmp.eq.s32.totalorder %s27, 1
      %p225 = scmp.ne.s32.totalorder %s220, %s222
      %p226 = scmp.eq.s32.totalorder %s27, 0
      %p227 = por %p225, %p226
      %p228 = scmp.ne.s32.totalorder %s220, %s222
      %p229 = scmp.eq.s32.totalorder %s32, 1
      %p230 = por %p228, %p229
      %p231 = scmp.ne.s32.totalorder %s222, %s223
      %p232 = scmp.eq.s32.totalorder %s32, 0
      %p233 = por %p231, %p232
      %p234 = scmp.ne.s32.totalorder %s222, %s223
      %p235 = scmp.eq.s32.totalorder %s33, 1
      %p236 = por %p234, %p235
      %p238 = scmp.ne.s32.totalorder %s223, %s237
      %p239 = scmp.eq.s32.totalorder %s33, 0
      %p240 = por %p238, %p239
      %s242 = sadd.s32 %s241, 1
      %p245 = scmp.eq.s32.totalorder %s27, 1
      %p246 = scmp.ne.s32.totalorder %s241, %s243
      %p247 = scmp.eq.s32.totalorder %s27, 0
      %p248 = por %p246, %p247
      %p249 = scmp.ne.s32.totalorder %s241, %s243
      %p250 = scmp.eq.s32.totalorder %s32, 1
      %p251 = por %p249, %p250
      %p252 = scmp.ne.s32.totalorder %s243, %s244
      %p253 = scmp.eq.s32.totalorder %s32, 0
      %p254 = por %p252, %p253
      %p255 = scmp.ne.s32.totalorder %s243, %s244
      %p256 = scmp.eq.s32.totalorder %s33, 1
      %p257 = por %p255, %p256
      %p259 = scmp.ne.s32.totalorder %s244, %s258
      %p260 = scmp.eq.s32.totalorder %s33, 0
      %p261 = por %p259, %p260
      %s263 = sadd.s32 %s262, 1
      %p266 = scmp.eq.s32.totalorder %s27, 1
      %p267 = scmp.ne.s32.totalorder %s262, %s264
      %p268 = scmp.eq.s32.totalorder %s27, 0
      %p269 = por %p267, %p268
      %p270 = scmp.ne.s32.totalorder %s262, %s264
      %p271 = scmp.eq.s32.totalorder %s32, 1
      %p272 = por %p270, %p271
      %p273 = scmp.ne.s32.totalorder %s264, %s265
      %p274 = scmp.eq.s32.totalorder %s32, 0
      %p275 = por %p273, %p274
      %p276 = scmp.ne.s32.totalorder %s264, %s265
      %p277 = scmp.eq.s32.totalorder %s33, 1
      %p278 = por %p276, %p277
      %p280 = scmp.ne.s32.totalorder %s265, %s279
      %p281 = scmp.eq.s32.totalorder %s33, 0
      %p282 = por %p280, %p281
      %s284 = sadd.s32 %s283, 1
      %p287 = scmp.eq.s32.totalorder %s27, 1
      %p288 = scmp.ne.s32.totalorder %s283, %s285
      %p289 = scmp.eq.s32.totalorder %s27, 0
      %p290 = por %p288, %p289
      %p291 = scmp.ne.s32.totalorder %s283, %s285
      %p292 = scmp.eq.s32.totalorder %s32, 1
      %p293 = por %p291, %p292
      %p294 = scmp.ne.s32.totalorder %s285, %s286
      %p295 = scmp.eq.s32.totalorder %s32, 0
      %p296 = por %p294, %p295
      %p297 = scmp.ne.s32.totalorder %s285, %s286
      %p298 = scmp.eq.s32.totalorder %s33, 1
      %p299 = por %p297, %p298
      %p301 = scmp.ne.s32.totalorder %s286, %s300
      %p302 = scmp.eq.s32.totalorder %s33, 0
      %p303 = por %p301, %p302
      %s305 = sadd.s32 %s304, 1
      %p308 = scmp.eq.s32.totalorder %s27, 1
      %p309 = scmp.ne.s32.totalorder %s304, %s306
      %p310 = scmp.eq.s32.totalorder %s27, 0
      %p311 = por %p309, %p310
      %p312 = scmp.ne.s32.totalorder %s304, %s306
      %p313 = scmp.eq.s32.totalorder %s32, 1
      %p314 = por %p312, %p313
      %p315 = scmp.ne.s32.totalorder %s306, %s307
      %p316 = scmp.eq.s32.totalorder %s32, 0
      %p317 = por %p315, %p316
      %p318 = scmp.ne.s32.totalorder %s306, %s307
      %p319 = scmp.eq.s32.totalorder %s33, 1
      %p320 = por %p318, %p319
      %p322 = scmp.ne.s32.totalorder %s307, %s321
      %p323 = scmp.eq.s32.totalorder %s33, 0
      %p324 = por %p322, %p323
      %s325 = ssub.s32 %s34, %s46
      %s326 = ssub.s32 %s35, %s42
      %s327 = sor.u32 %s325, %s326
      %p328 = scmp.eq.s32.totalorder %s327, 0
      %s330 = sadd.s32 %s329, 1
      %s331 = scalar_select %p328, %s329, %s330
      %p334 = pneg %p328
      %p335 = scmp.eq.s32.totalorder %s27, 1
      %p336 = por %p334, %p335
      %p337 = scmp.ne.s32.totalorder %s329, %s332
      %p338 = scmp.eq.s32.totalorder %s27, 0
      %p339 = por %p337, %p338
      %p340 = scmp.ne.s32.totalorder %s329, %s332
      %p341 = scmp.eq.s32.totalorder %s32, 1
      %p342 = por %p340, %p341
      %p343 = scmp.ne.s32.totalorder %s332, %s333
      %p344 = scmp.eq.s32.totalorder %s32, 0
      %p345 = por %p343, %p344
      %p346 = scmp.ne.s32.totalorder %s332, %s333
      %p347 = scmp.eq.s32.totalorder %s33, 1
      %p348 = por %p346, %p347
      %p350 = scmp.ne.s32.totalorder %s333, %s349
      %p351 = scmp.eq.s32.totalorder %s33, 0
      %p352 = por %p350, %p351
      %p353 = scmp.le.s32.totalorder 1, %s27
      %p354 = scmp.lt.s32.totalorder %s27, 3
      %p355 = pnand %p353, %p354
      %p356 = pneg %p355
      // Predicated region
      $region9: #{tpu_custom_call.1} parent=5 // pred_check
        _
      $region10: #{tpu_custom_call.1} parent=5 // pred_check_branch
        %358 = sbr.rel (%p355) target = $region12
      $region11: #{tpu_custom_call.1} parent=5 // pred_region
        %s359 = ssub.s32 %s27, 1
        // Predicated region
        $region13: #{tpu_custom_call.1} parent=11 // pred_check
          %p360 = pneg %p86
        $region14: #{tpu_custom_call.1} parent=11 // pred_check_branch
          %362 = sbr.rel (%p360) target = $region16
        $region15: #{tpu_custom_call.1} parent=11 // pred_region
          _
        $region16: #{tpu_custom_call.1} parent=11 // pred_fallthru
          _
        // Predicated region
        $region17: #{tpu_custom_call.1} parent=11 // pred_check
          %p363 = pneg %p107
        $region18: #{tpu_custom_call.1} parent=11 // pred_check_branch
          %365 = sbr.rel (%p363) target = $region20
        $region19: #{tpu_custom_call.1} parent=11 // pred_region
          _
        $region20: #{tpu_custom_call.1} parent=11 // pred_fallthru
          _
        // Predicated region
        $region21: #{tpu_custom_call.1} parent=11 // pred_check
          %p366 = pneg %p128
        $region22: #{tpu_custom_call.1} parent=11 // pred_check_branch
          %368 = sbr.rel (%p366) target = $region24
        $region23: #{tpu_custom_call.1} parent=11 // pred_region
          _
        $region24: #{tpu_custom_call.1} parent=11 // pred_fallthru
          _
        // Predicated region
        $region25: #{tpu_custom_call.1} parent=11 // pred_check
          %p369 = pneg %p149
        $region26: #{tpu_custom_call.1} parent=11 // pred_check_branch
          %371 = sbr.rel (%p369) target = $region28
        $region27: #{tpu_custom_call.1} parent=11 // pred_region
          _
        $region28: #{tpu_custom_call.1} parent=11 // pred_fallthru
          _
        // Predicated region
        $region29: #{tpu_custom_call.1} parent=11 // pred_check
          %p372 = pneg %p170
        $region30: #{tpu_custom_call.1} parent=11 // pred_check_branch
          %374 = sbr.rel (%p372) target = $region32
        $region31: #{tpu_custom_call.1} parent=11 // pred_region
          _
        $region32: #{tpu_custom_call.1} parent=11 // pred_fallthru
          _
        // Predicated region
        $region33: #{tpu_custom_call.1} parent=11 // pred_check
          %p375 = pneg %p191
        $region34: #{tpu_custom_call.1} parent=11 // pred_check_branch
          %377 = sbr.rel (%p375) target = $region36
        $region35: #{tpu_custom_call.1} parent=11 // pred_region
          %s379 = ssub.s32 16, 16
          %380 = vsyncadd [#allocation7], %s379
          %s382 = sshll.u32 [#allocation6], 4
          %s383 = int_to_ptr.vmem [resolvable:$true] %s382
          %385 = dma.hbm_to_vmem [thread:$0]  %s6, 16, %s383, [#allocation7]
        $region36: #{tpu_custom_call.1} parent=11 // pred_fallthru
          _
        // Predicated region
        $region37: #{tpu_custom_call.1} parent=11 // pred_check
          %p386 = pneg %p212
        $region38: #{tpu_custom_call.1} parent=11 // pred_check_branch
          %388 = sbr.rel (%p386) target = $region40
        $region39: #{tpu_custom_call.1} parent=11 // pred_region
          %s390 = ssub.s32 256, 256
          %391 = vsyncadd [#allocation7], %s390
          %s392 = sshll.u32 [#allocation8], 4
          %s393 = int_to_ptr.vmem [resolvable:$true] %s392
          %398 = dma.hbm_to_vmem [thread:$0]  %s7, 256, %s393, [#allocation7], 64, 64, 4
        $region40: #{tpu_custom_call.1} parent=11 // pred_fallthru
          _
        // Predicated region
        $region41: #{tpu_custom_call.1} parent=11 // pred_check
          %p399 = pneg %p233
        $region42: #{tpu_custom_call.1} parent=11 // pred_check_branch
          %401 = sbr.rel (%p399) target = $region44
        $region43: #{tpu_custom_call.1} parent=11 // pred_region
          %s403 = ssub.s32 16, 16
          %404 = vsyncadd [#allocation10], %s403
          %s406 = sshll.u32 [#allocation9], 4
          %s407 = int_to_ptr.vmem [resolvable:$true] %s406
          %409 = dma.hbm_to_vmem [thread:$0]  %s8, 16, %s407, [#allocation10]
        $region44: #{tpu_custom_call.1} parent=11 // pred_fallthru
          _
        // Predicated region
        $region45: #{tpu_custom_call.1} parent=11 // pred_check
          %p410 = pneg %p254
        $region46: #{tpu_custom_call.1} parent=11 // pred_check_branch
          %412 = sbr.rel (%p410) target = $region48
        $region47: #{tpu_custom_call.1} parent=11 // pred_region
          _
        $region48: #{tpu_custom_call.1} parent=11 // pred_fallthru
          _
        // Predicated region
        $region49: #{tpu_custom_call.1} parent=11 // pred_check
          %p413 = pneg %p275
        $region50: #{tpu_custom_call.1} parent=11 // pred_check_branch
          %415 = sbr.rel (%p413) target = $region52
        $region51: #{tpu_custom_call.1} parent=11 // pred_region
          _
        $region52: #{tpu_custom_call.1} parent=11 // pred_fallthru
          _
        // Predicated region
        $region53: #{tpu_custom_call.1} parent=11 // pred_check
          %p416 = pneg %p296
        $region54: #{tpu_custom_call.1} parent=11 // pred_check_branch
          %418 = sbr.rel (%p416) target = $region56
        $region55: #{tpu_custom_call.1} parent=11 // pred_region
          _
        $region56: #{tpu_custom_call.1} parent=11 // pred_fallthru
          _
        // Predicated region
        $region57: #{tpu_custom_call.1} parent=11 // pred_check
          %p419 = pneg %p317
        $region58: #{tpu_custom_call.1} parent=11 // pred_check_branch
          %421 = sbr.rel (%p419) target = $region60
        $region59: #{tpu_custom_call.1} parent=11 // pred_region
          _
        $region60: #{tpu_custom_call.1} parent=11 // pred_fallthru
          _
      $region12: #{tpu_custom_call.1} parent=5 // pred_fallthru
        _
      %p422 = scmp.lt.s32.totalorder %s27, 2
      // Predicated region
      $region61: #{tpu_custom_call.1} parent=5 // pred_check
        %p423 = pneg %p422
      $region62: #{tpu_custom_call.1} parent=5 // pred_check_branch
        %425 = sbr.rel (%p423) target = $region64
      $region63: #{tpu_custom_call.1} parent=5 // pred_region
        // Predicated region
        $region65: #{tpu_custom_call.1} parent=63 // pred_check
          %p426 = pneg %p59
        $region66: #{tpu_custom_call.1} parent=63 // pred_check_branch
          %428 = sbr.rel (%p426) target = $region68
        $region67: #{tpu_custom_call.1} parent=63 // pred_region
          %s429 = sand.u32 %s49, 1
          %s430 = scalar_lea.sflag [#allocation4], %s429
          %s431 = sand.u32 %s49, 1
          %s432 = smul.addr %s431, 4
          %s433 = scalar_lea.vmem [#allocation3], %s432
          %s435 = ssub.s32 64, 64
          %436 = vsyncadd %s430, %s435
          %s437 = smul.addr %s34, 64
          %s438 = scalar_lea.hbm %s0, %s437
          %s440 = sshll.u32 %s433, 4
          %s441 = int_to_ptr.vmem [resolvable:$true] %s440
          %443 = dma.hbm_to_vmem [thread:$0]  %s438, 64, %s441, %s430
        $region68: #{tpu_custom_call.1} parent=63 // pred_fallthru
          _
      $region64: #{tpu_custom_call.1} parent=5 // pred_fallthru
        _
      %p444 = scmp.le.s32.totalorder 1, %s27
      %p445 = scmp.lt.s32.totalorder %s27, 3
      %p446 = pnand %p444, %p445
      %p447 = pneg %p446
      // Predicated region
      $region69: #{tpu_custom_call.1} parent=5 // pred_check
        _
      $region70: #{tpu_custom_call.1} parent=5 // pred_check_branch
        %449 = sbr.rel (%p446) target = $region72
      $region71: #{tpu_custom_call.1} parent=5 // pred_region
        %s450 = ssub.s32 %s27, 1
        %s451 = sand.u32 %s52, 1
        %s452 = scalar_lea.sflag [#allocation4], %s451
        %s453 = sand.u32 %s52, 1
        %s454 = smul.addr %s453, 4
        %s455 = scalar_lea.vmem [#allocation3], %s454
        // Predicated region
        $region73: #{tpu_custom_call.1} parent=71 // pred_check
          %p456 = pneg %p65
        $region74: #{tpu_custom_call.1} parent=71 // pred_check_branch
          %458 = sbr.rel (%p456) target = $region76
        $region75: #{tpu_custom_call.1} parent=71 // pred_region
          %459 = dma.done %s452, 64
        $region76: #{tpu_custom_call.1} parent=71 // pred_fallthru
          _
        // Predicated region
        $region77: #{tpu_custom_call.1} parent=71 // pred_check
          %p460 = pneg %p191
        $region78: #{tpu_custom_call.1} parent=71 // pred_check_branch
          %462 = sbr.rel (%p460) target = $region80
        $region79: #{tpu_custom_call.1} parent=71 // pred_region
          %463 = dma.done [#allocation7], 16
        $region80: #{tpu_custom_call.1} parent=71 // pred_fallthru
          _
        // Predicated region
        $region81: #{tpu_custom_call.1} parent=71 // pred_check
          %p464 = pneg %p212
        $region82: #{tpu_custom_call.1} parent=71 // pred_check_branch
          %466 = sbr.rel (%p464) target = $region84
        $region83: #{tpu_custom_call.1} parent=71 // pred_region
          %467 = dma.done [#allocation7], 256
        $region84: #{tpu_custom_call.1} parent=71 // pred_fallthru
          _
        // Predicated region
        $region85: #{tpu_custom_call.1} parent=71 // pred_check
          %p468 = pneg %p233
        $region86: #{tpu_custom_call.1} parent=71 // pred_check_branch
          %470 = sbr.rel (%p468) target = $region88
        $region87: #{tpu_custom_call.1} parent=71 // pred_region
          %471 = dma.done [#allocation10], 16
        $region88: #{tpu_custom_call.1} parent=71 // pred_fallthru
          _
        %s472 = sand.u32 %s52, 1
        %s473 = scalar_lea.sflag [#allocation4], %s472
        %s474 = sand.u32 %s52, 1
        %s475 = smul.addr %s474, 4
        %s476 = scalar_lea.vmem [#allocation3], %s475
        %p477 = pneg %p65
        %p478 = pneg %p62
        %p479 = pneg %p86
        %p480 = pneg %p83
        %p481 = pneg %p107
        %p482 = pneg %p104
        %p483 = pneg %p128
        %p484 = pneg %p125
        %p485 = pneg %p149
        %p486 = pneg %p146
        %p487 = pneg %p170
        %p488 = pneg %p167
        %p489 = pneg %p191
        %p490 = pneg %p188
        %p491 = pneg %p212
        %p492 = pneg %p209
        %p493 = pneg %p233
        %p494 = pneg %p230
        %p495 = pneg %p254
        %p496 = pneg %p251
        %p497 = pneg %p275
        %p498 = pneg %p272
        %p499 = pneg %p296
        %p500 = pneg %p293
        %p501 = pneg %p317
        %p502 = pneg %p314
        %p503 = pneg %p345
        %p504 = pneg %p342
        %s505 = sand.u32 %s332, 1
        %s506 = scalar_lea.sflag [#allocation5], %s505
        %s507 = sand.u32 %s332, 1
        %s508 = smul.addr %s507, 8
        %s509 = scalar_lea.vmem [#allocation11], %s508
        %v511 = vld [vmem:[%s455] sm:$0xf]
        %s512 = smul.u32 %s37, 8
        %s513 = sshra.s32 %s512, 3
        %s514 = sand.u32 %s512, 7
        %s515 = smul.addr %s513, 4
        %s516 = scalar_lea.vmem %s455, %s515 [#allocation3]
        %v517 = vld [vmem:[%s516] sm:$0xf]
        %v518 = vld [vmem:[%s3] sm:$0xf]
        %v519 = vld [vmem:[%s3 + $0x4] sm:$0xf]
        %v520 = vld [vmem:[%s3 + $0x8] sm:$0xf]
        %v521 = vld [vmem:[%s3 + $0xc] sm:$0xf]
        %v522 = vld [vmem:[%s4] sm:$0x1]
        %v524 = vlaneseq
        %v525 = vshrl.u32 %v524, 7
        %v526 = vsub.s32 0, %v525
        %v527 = vrot.slane %v522, %v526
        %v533 = vunpack.c.l.b16 %v518
        %v534 = vunpack.c.l.b16 %v519
        %v535 = vunpack.c.l.b16 %v520
        %v536 = vunpack.c.l.b16 %v521
        %v537 = vpack.c.b16 %v534, %v533
        %v538 = vpack.c.b16 %v536, %v535
        %vm541 = vcmask 261120
        %v543 = vsel %vm541, %v511, 0
        %545 = vmatprep.subr.bf16.mxu0 0
        %546 = vmatpush1.bf16.msra.mxu0 %v537
        %547 = vmatprep.subr.bf16.mxu0 0
        %548 = vmatpush1.bf16.msra.mxu0 %v538
        %549 = vmatprep.subr.bf16.mxu0 0
        %550 = vmatpush1.bf16.msra.mxu0 0
        %551 = vmatprep.subr.bf16.mxu0 0
        %552 = vmatpush1.bf16.msra.mxu0 0
        %553 = vmatprep.subr.bf16.mxu0 0
        %554 = vmatpush1.bf16.msra.mxu0 0
        %555 = vmatprep.subr.bf16.mxu0 0
        %556 = vmatpush1.bf16.msra.mxu0 0
        %557 = vmatprep.subr.bf16.mxu0 0
        %558 = vmatpush1.bf16.msra.mxu0 0
        %559 = vmatprep.subr.bf16.mxu0 0
        %560 = vmatpush1.bf16.msra.mxu0 0
        %561 = vmatprep.subr.bf16.mxu0 0
        %562 = vmatpush1.bf16.msra.mxu0 0
        %563 = vmatprep.subr.bf16.mxu0 0
        %564 = vmatpush1.bf16.msra.mxu0 0
        %565 = vmatprep.subr.bf16.mxu0 0
        %566 = vmatpush1.bf16.msra.mxu0 0
        %567 = vmatprep.subr.bf16.mxu0 0
        %568 = vmatpush1.bf16.msra.mxu0 0
        %569 = vmatprep.subr.bf16.mxu0 0
        %570 = vmatpush1.bf16.msra.mxu0 0
        %571 = vmatprep.subr.bf16.mxu0 0
        %572 = vmatpush1.bf16.msra.mxu0 0
        %573 = vmatprep.subr.bf16.mxu0 0
        %574 = vmatpush1.bf16.msra.mxu0 0
        %575 = vmatprep.subr.bf16.mxu0 0
        %576 = vmatpush1.bf16.msra.mxu0 0
        %577 = vmatprep.mubr.bf16.mxu0 0
        %578 = vmatmul.mubr.bf16.gmra.mrb[0].mxu0 %v543
        %v579 = vpop.f32.mrb[0].mxu0
        %v580 = vadd.f32 %v527, %v579
        %v581 = vpop.f32.mrb[0].mxu0
        %v582 = vpop.f32.mrb[0].mxu0
        %v583 = vpop.f32.mrb[0].mxu0
        %584 = vdwg.mxu0
        %v585 = vld [vmem:[%s5] sm:$0xf]
        %v586 = vld [vmem:[%s5 + $0x4] sm:$0xf]
        %v587 = vld [vmem:[%s5 + $0x8] sm:$0xf]
        %v588 = vld [vmem:[%s5 + $0xc] sm:$0xf]
        %v589 = vld [vmem:[#allocation6] sm:$0x1]
        %v591 = vlaneseq
        %v592 = vshrl.u32 %v591, 7
        %v593 = vsub.s32 0, %v592
        %v594 = vrot.slane %v589, %v593
        %v600 = vunpack.c.l.b16 %v585
        %v601 = vunpack.c.l.b16 %v586
        %v602 = vunpack.c.l.b16 %v587
        %v603 = vunpack.c.l.b16 %v588
        %v604 = vpack.c.b16 %v601, %v600
        %v605 = vpack.c.b16 %v603, %v602
        %608 = vmatprep.subr.bf16.mxu0 0
        %609 = vmatpush1.bf16.msra.mxu0 %v604
        %610 = vmatprep.subr.bf16.mxu0 0
        %611 = vmatpush1.bf16.msra.mxu0 %v605
        %612 = vmatprep.subr.bf16.mxu0 0
        %613 = vmatpush1.bf16.msra.mxu0 0
        %614 = vmatprep.subr.bf16.mxu0 0
        %615 = vmatpush1.bf16.msra.mxu0 0
        %616 = vmatprep.subr.bf16.mxu0 0
        %617 = vmatpush1.bf16.msra.mxu0 0
        %618 = vmatprep.subr.bf16.mxu0 0
        %619 = vmatpush1.bf16.msra.mxu0 0
        %620 = vmatprep.subr.bf16.mxu0 0
        %621 = vmatpush1.bf16.msra.mxu0 0
        %622 = vmatprep.subr.bf16.mxu0 0
        %623 = vmatpush1.bf16.msra.mxu0 0
        %624 = vmatprep.subr.bf16.mxu0 0
        %625 = vmatpush1.bf16.msra.mxu0 0
        %626 = vmatprep.subr.bf16.mxu0 0
        %627 = vmatpush1.bf16.msra.mxu0 0
        %628 = vmatprep.subr.bf16.mxu0 0
        %629 = vmatpush1.bf16.msra.mxu0 0
        %630 = vmatprep.subr.bf16.mxu0 0
        %631 = vmatpush1.bf16.msra.mxu0 0
        %632 = vmatprep.subr.bf16.mxu0 0
        %633 = vmatpush1.bf16.msra.mxu0 0
        %634 = vmatprep.subr.bf16.mxu0 0
        %635 = vmatpush1.bf16.msra.mxu0 0
        %636 = vmatprep.subr.bf16.mxu0 0
        %637 = vmatpush1.bf16.msra.mxu0 0
        %638 = vmatprep.subr.bf16.mxu0 0
        %639 = vmatpush1.bf16.msra.mxu0 0
        %640 = vmatprep.mubr.bf16.mxu0 0
        %641 = vmatmul.mubr.bf16.gmra.mrb[0].mxu0 %v543
        %v642 = vpop.f32.mrb[0].mxu0
        %v643 = vadd.f32 %v594, %v642
        %v644 = vpop.f32.mrb[0].mxu0
        %v645 = vpop.f32.mrb[0].mxu0
        %v646 = vpop.f32.mrb[0].mxu0
        %647 = vdwg.mxu0
        %v648 = vld [vmem:[%s1] sm:$0xf]
        %v649 = vld [vmem:[%s1 + $0x4] sm:$0xf]
        %v650 = vld [vmem:[%s1 + $0x8] sm:$0xf]
        %v651 = vld [vmem:[%s1 + $0xc] sm:$0xf]
        %v652 = vld [vmem:[%s2] sm:$0x1]
        %v654 = vlaneseq
        %v655 = vshrl.u32 %v654, 7
        %v656 = vsub.s32 0, %v655
        %v657 = vrot.slane %v652, %v656
        %v663 = vunpack.c.l.b16 %v648
        %v664 = vunpack.c.l.b16 %v649
        %v665 = vunpack.c.l.b16 %v650
        %v666 = vunpack.c.l.b16 %v651
        %v667 = vpack.c.b16 %v664, %v663
        %v668 = vpack.c.b16 %v666, %v665
        %v672 = vsel %vm541, %v517, 0
        %674 = vmatprep.subr.bf16.mxu0 0
        %675 = vmatpush1.bf16.msra.mxu0 %v667
        %676 = vmatprep.subr.bf16.mxu0 0
        %677 = vmatpush1.bf16.msra.mxu0 %v668
        %678 = vmatprep.subr.bf16.mxu0 0
        %679 = vmatpush1.bf16.msra.mxu0 0
        %680 = vmatprep.subr.bf16.mxu0 0
        %681 = vmatpush1.bf16.msra.mxu0 0
        %682 = vmatprep.subr.bf16.mxu0 0
        %683 = vmatpush1.bf16.msra.mxu0 0
        %684 = vmatprep.subr.bf16.mxu0 0
        %685 = vmatpush1.bf16.msra.mxu0 0
        %686 = vmatprep.subr.bf16.mxu0 0
        %687 = vmatpush1.bf16.msra.mxu0 0
        %688 = vmatprep.subr.bf16.mxu0 0
        %689 = vmatpush1.bf16.msra.mxu0 0
        %690 = vmatprep.subr.bf16.mxu0 0
        %691 = vmatpush1.bf16.msra.mxu0 0
        %692 = vmatprep.subr.bf16.mxu0 0
        %693 = vmatpush1.bf16.msra.mxu0 0
        %694 = vmatprep.subr.bf16.mxu0 0
        %695 = vmatpush1.bf16.msra.mxu0 0
        %696 = vmatprep.subr.bf16.mxu0 0
        %697 = vmatpush1.bf16.msra.mxu0 0
        %698 = vmatprep.subr.bf16.mxu0 0
        %699 = vmatpush1.bf16.msra.mxu0 0
        %700 = vmatprep.subr.bf16.mxu0 0
        %701 = vmatpush1.bf16.msra.mxu0 0
        %702 = vmatprep.subr.bf16.mxu0 0
        %703 = vmatpush1.bf16.msra.mxu0 0
        %704 = vmatprep.subr.bf16.mxu0 0
        %705 = vmatpush1.bf16.msra.mxu0 0
        %706 = vmatprep.mubr.bf16.mxu0 0
        %707 = vmatmul.mubr.bf16.gmra.mrb[0].mxu0 %v672
        %v708 = vpop.f32.mrb[0].mxu0
        %v709 = vadd.f32 %v657, %v708
        %v710 = vpop.f32.mrb[0].mxu0
        %v711 = vpop.f32.mrb[0].mxu0
        %v712 = vpop.f32.mrb[0].mxu0
        %713 = vdwg.mxu0
        %v714 = vmul.f32 %v709, 0.35355338
        %v715 = vpack.c.bf16 %v714, %v714
        %v716 = vpack.c.bf16 %v580, %v580
        %v717 = vpack.c.bf16 %v643, %v643
        %vm718 = vcmask 64512
        %v720 = vsel %vm718, %v715, 0
        %v723 = vsel %vm718, %v716, 0
        %725 = vmatprep.subr.bf16.mxu0 0
        %726 = vmatpush1.bf16.xpose.msra.mxu0 %v723
        %727 = vmatprep.subr.bf16.mxu0 0
        %728 = vmatpush1.bf16.xpose.msra.mxu0 0
        %729 = vmatprep.subr.bf16.mxu0 0
        %730 = vmatpush1.bf16.xpose.msra.mxu0 0
        %731 = vmatprep.subr.bf16.mxu0 0
        %732 = vmatpush1.bf16.xpose.msra.mxu0 0
        %733 = vmatprep.subr.bf16.mxu0 0
        %734 = vmatpush1.bf16.xpose.msra.mxu0 0
        %735 = vmatprep.subr.bf16.mxu0 0
        %736 = vmatpush1.bf16.xpose.msra.mxu0 0
        %737 = vmatprep.subr.bf16.mxu0 0
        %738 = vmatpush1.bf16.xpose.msra.mxu0 0
        %739 = vmatprep.subr.bf16.mxu0 0
        %740 = vmatpush1.bf16.xpose.msra.mxu0 0
        %741 = vmatprep.subr.bf16.mxu0 0
        %742 = vmatpush1.bf16.xpose.msra.mxu0 0
        %743 = vmatprep.subr.bf16.mxu0 0
        %744 = vmatpush1.bf16.xpose.msra.mxu0 0
        %745 = vmatprep.subr.bf16.mxu0 0
        %746 = vmatpush1.bf16.xpose.msra.mxu0 0
        %747 = vmatprep.subr.bf16.mxu0 0
        %748 = vmatpush1.bf16.xpose.msra.mxu0 0
        %749 = vmatprep.subr.bf16.mxu0 0
        %750 = vmatpush1.bf16.xpose.msra.mxu0 0
        %751 = vmatprep.subr.bf16.mxu0 0
        %752 = vmatpush1.bf16.xpose.msra.mxu0 0
        %753 = vmatprep.subr.bf16.mxu0 0
        %754 = vmatpush1.bf16.xpose.msra.mxu0 0
        %755 = vmatprep.subr.bf16.mxu0 0
        %756 = vmatpush1.bf16.xpose.msra.mxu0 0
        %757 = vmatprep.mubr.bf16.mxu0 0
        %758 = vmatmul.mubr.bf16.gmra.mrb[0].mxu0 %v720
        %v759 = vpop.f32.mrb[0].mxu0
        %v760 = vadd.f32 0.0, %v759
        %v761 = vpop.f32.mrb[0].mxu0
        %v762 = vpop.f32.mrb[0].mxu0
        %v763 = vpop.f32.mrb[0].mxu0
        %764 = vdwg.mxu0
        %v765 = vsel %vm718, %v760, -inf
        %766 = vmax.xlane.f32.xlu0 %v765
        %v767 = vpop.xlane.xlu0 %766
        %v768 = vsub.f32 %v760, %v767
        %v769 = vmul.f32 %v768, 1.442695
        %v770 = vpow.pop %v769
        %v771 = vsel %vm718, %v770, 0.0
        %772 = vadd.xlane.f32.xlu0 %v771
        %v773 = vpop.xlane.xlu0 %772
        %v774 = vrcp.pop %v773
        %v775 = vmul.f32 %v770, %v774
        %v776 = vpack.c.bf16 %v775, %v775
        %v778 = vsel %vm718, %v776, 0
        %vm780 = vcmask 1043456
        %v782 = vsel %vm780, %v717, 0
        %784 = vmatprep.subr.bf16.mxu0 0
        %785 = vmatpush1.bf16.msra.mxu0 %v782
        %786 = vmatprep.subr.bf16.mxu0 0
        %787 = vmatpush1.bf16.msra.mxu0 0
        %788 = vmatprep.subr.bf16.mxu0 0
        %789 = vmatpush1.bf16.msra.mxu0 0
        %790 = vmatprep.subr.bf16.mxu0 0
        %791 = vmatpush1.bf16.msra.mxu0 0
        %792 = vmatprep.subr.bf16.mxu0 0
        %793 = vmatpush1.bf16.msra.mxu0 0
        %794 = vmatprep.subr.bf16.mxu0 0
        %795 = vmatpush1.bf16.msra.mxu0 0
        %796 = vmatprep.subr.bf16.mxu0 0
        %797 = vmatpush1.bf16.msra.mxu0 0
        %798 = vmatprep.subr.bf16.mxu0 0
        %799 = vmatpush1.bf16.msra.mxu0 0
        %800 = vmatprep.subr.bf16.mxu0 0
        %801 = vmatpush1.bf16.msra.mxu0 0
        %802 = vmatprep.subr.bf16.mxu0 0
        %803 = vmatpush1.bf16.msra.mxu0 0
        %804 = vmatprep.subr.bf16.mxu0 0
        %805 = vmatpush1.bf16.msra.mxu0 0
        %806 = vmatprep.subr.bf16.mxu0 0
        %807 = vmatpush1.bf16.msra.mxu0 0
        %808 = vmatprep.subr.bf16.mxu0 0
        %809 = vmatpush1.bf16.msra.mxu0 0
        %810 = vmatprep.subr.bf16.mxu0 0
        %811 = vmatpush1.bf16.msra.mxu0 0
        %812 = vmatprep.subr.bf16.mxu0 0
        %813 = vmatpush1.bf16.msra.mxu0 0
        %814 = vmatprep.subr.bf16.mxu0 0
        %815 = vmatpush1.bf16.msra.mxu0 0
        %816 = vmatprep.mubr.bf16.mxu0 0
        %817 = vmatmul.mubr.bf16.gmra.mrb[0].mxu0 %v778
        %v818 = vpop.f32.mrb[0].mxu0
        %v819 = vadd.f32 0.0, %v818
        %v820 = vpop.f32.mrb[0].mxu0
        %v821 = vpop.f32.mrb[0].mxu0
        %v822 = vpop.f32.mrb[0].mxu0
        %823 = vdwg.mxu0
        %824 = vst.msk [vmem:[#allocation2] sm:$0xff] %vm718, %v819
        %826 = vrot.lane.b32.xlu0 %v715, 120
        %v827 = vpop.permute.xlu0 %826
        %829 = vrot.lane.b32.xlu0 %v716, 120
        %v830 = vpop.permute.xlu0 %829
        %v832 = vsel %vm718, %v827, 0
        %v835 = vsel %vm718, %v830, 0
        %837 = vmatprep.subr.bf16.mxu0 0
        %838 = vmatpush1.bf16.xpose.msra.mxu0 %v835
        %839 = vmatprep.subr.bf16.mxu0 0
        %840 = vmatpush1.bf16.xpose.msra.mxu0 0
        %841 = vmatprep.subr.bf16.mxu0 0
        %842 = vmatpush1.bf16.xpose.msra.mxu0 0
        %843 = vmatprep.subr.bf16.mxu0 0
        %844 = vmatpush1.bf16.xpose.msra.mxu0 0
        %845 = vmatprep.subr.bf16.mxu0 0
        %846 = vmatpush1.bf16.xpose.msra.mxu0 0
        %847 = vmatprep.subr.bf16.mxu0 0
        %848 = vmatpush1.bf16.xpose.msra.mxu0 0
        %849 = vmatprep.subr.bf16.mxu0 0
        %850 = vmatpush1.bf16.xpose.msra.mxu0 0
        %851 = vmatprep.subr.bf16.mxu0 0
        %852 = vmatpush1.bf16.xpose.msra.mxu0 0
        %853 = vmatprep.subr.bf16.mxu0 0
        %854 = vmatpush1.bf16.xpose.msra.mxu0 0
        %855 = vmatprep.subr.bf16.mxu0 0
        %856 = vmatpush1.bf16.xpose.msra.mxu0 0
        %857 = vmatprep.subr.bf16.mxu0 0
        %858 = vmatpush1.bf16.xpose.msra.mxu0 0
        %859 = vmatprep.subr.bf16.mxu0 0
        %860 = vmatpush1.bf16.xpose.msra.mxu0 0
        %861 = vmatprep.subr.bf16.mxu0 0
        %862 = vmatpush1.bf16.xpose.msra.mxu0 0
        %863 = vmatprep.subr.bf16.mxu0 0
        %864 = vmatpush1.bf16.xpose.msra.mxu0 0
        %865 = vmatprep.subr.bf16.mxu0 0
        %866 = vmatpush1.bf16.xpose.msra.mxu0 0
        %867 = vmatprep.subr.bf16.mxu0 0
        %868 = vmatpush1.bf16.xpose.msra.mxu0 0
        %869 = vmatprep.mubr.bf16.mxu0 0
        %870 = vmatmul.mubr.bf16.gmra.mrb[0].mxu0 %v832
        %v871 = vpop.f32.mrb[0].mxu0
        %v872 = vadd.f32 0.0, %v871
        %v873 = vpop.f32.mrb[0].mxu0
        %v874 = vpop.f32.mrb[0].mxu0
        %v875 = vpop.f32.mrb[0].mxu0
        %876 = vdwg.mxu0
        %v877 = vsel %vm718, %v872, -inf
        %878 = vmax.xlane.f32.xlu0 %v877
        %v879 = vpop.xlane.xlu0 %878
        %v880 = vsub.f32 %v872, %v879
        %v881 = vmul.f32 %v880, 1.442695
        %v882 = vpow.pop %v881
        %v883 = vsel %vm718, %v882, 0.0
        %884 = vadd.xlane.f32.xlu0 %v883
        %v885 = vpop.xlane.xlu0 %884
        %v886 = vrcp.pop %v885
        %v887 = vmul.f32 %v882, %v886
        %v888 = vpack.c.bf16 %v887, %v887
        %890 = vrot.lane.b32.xlu0 %v717, 120
        %v891 = vpop.permute.xlu0 %890
        %v893 = vsel %vm718, %v888, 0
        %v896 = vsel %vm780, %v891, 0
        %898 = vmatprep.subr.bf16.mxu0 0
        %899 = vmatpush1.bf16.msra.mxu0 %v896
        %900 = vmatprep.subr.bf16.mxu0 0
        %901 = vmatpush1.bf16.msra.mxu0 0
        %902 = vmatprep.subr.bf16.mxu0 0
        %903 = vmatpush1.bf16.msra.mxu0 0
        %904 = vmatprep.subr.bf16.mxu0 0
        %905 = vmatpush1.bf16.msra.mxu0 0
        %906 = vmatprep.subr.bf16.mxu0 0
        %907 = vmatpush1.bf16.msra.mxu0 0
        %908 = vmatprep.subr.bf16.mxu0 0
        %909 = vmatpush1.bf16.msra.mxu0 0
        %910 = vmatprep.subr.bf16.mxu0 0
        %911 = vmatpush1.bf16.msra.mxu0 0
        %912 = vmatprep.subr.bf16.mxu0 0
        %913 = vmatpush1.bf16.msra.mxu0 0
        %914 = vmatprep.subr.bf16.mxu0 0
        %915 = vmatpush1.bf16.msra.mxu0 0
        %916 = vmatprep.subr.bf16.mxu0 0
        %917 = vmatpush1.bf16.msra.mxu0 0
        %918 = vmatprep.subr.bf16.mxu0 0
        %919 = vmatpush1.bf16.msra.mxu0 0
        %920 = vmatprep.subr.bf16.mxu0 0
        %921 = vmatpush1.bf16.msra.mxu0 0
        %922 = vmatprep.subr.bf16.mxu0 0
        %923 = vmatpush1.bf16.msra.mxu0 0
        %924 = vmatprep.subr.bf16.mxu0 0
        %925 = vmatpush1.bf16.msra.mxu0 0
        %926 = vmatprep.subr.bf16.mxu0 0
        %927 = vmatpush1.bf16.msra.mxu0 0
        %928 = vmatprep.subr.bf16.mxu0 0
        %929 = vmatpush1.bf16.msra.mxu0 0
        %930 = vmatprep.mubr.bf16.mxu0 0
        %931 = vmatmul.mubr.bf16.gmra.mrb[0].mxu0 %v893
        %v932 = vpop.f32.mrb[0].mxu0
        %v933 = vadd.f32 0.0, %v932
        %v934 = vpop.f32.mrb[0].mxu0
        %v935 = vpop.f32.mrb[0].mxu0
        %v936 = vpop.f32.mrb[0].mxu0
        %937 = vdwg.mxu0
        %939 = vrot.lane.b32.xlu0 %v933, 8
        %v940 = vpop.permute.xlu0 %939
        %vm942 = vcmask 130112
        %943 = vst.msk [vmem:[#allocation2] sm:$0xff] %vm942, %v940
        %944 = vrot.lane.b32.xlu0 %v715, 112
        %v945 = vpop.permute.xlu0 %944
        %946 = vrot.lane.b32.xlu0 %v716, 112
        %v947 = vpop.permute.xlu0 %946
        %v949 = vsel %vm718, %v945, 0
        %v952 = vsel %vm718, %v947, 0
        %954 = vmatprep.subr.bf16.mxu0 0
        %955 = vmatpush1.bf16.xpose.msra.mxu0 %v952
        %956 = vmatprep.subr.bf16.mxu0 0
        %957 = vmatpush1.bf16.xpose.msra.mxu0 0
        %958 = vmatprep.subr.bf16.mxu0 0
        %959 = vmatpush1.bf16.xpose.msra.mxu0 0
        %960 = vmatprep.subr.bf16.mxu0 0
        %961 = vmatpush1.bf16.xpose.msra.mxu0 0
        %962 = vmatprep.subr.bf16.mxu0 0
        %963 = vmatpush1.bf16.xpose.msra.mxu0 0
        %964 = vmatprep.subr.bf16.mxu0 0
        %965 = vmatpush1.bf16.xpose.msra.mxu0 0
        %966 = vmatprep.subr.bf16.mxu0 0
        %967 = vmatpush1.bf16.xpose.msra.mxu0 0
        %968 = vmatprep.subr.bf16.mxu0 0
        %969 = vmatpush1.bf16.xpose.msra.mxu0 0
        %970 = vmatprep.subr.bf16.mxu0 0
        %971 = vmatpush1.bf16.xpose.msra.mxu0 0
        %972 = vmatprep.subr.bf16.mxu0 0
        %973 = vmatpush1.bf16.xpose.msra.mxu0 0
        %974 = vmatprep.subr.bf16.mxu0 0
        %975 = vmatpush1.bf16.xpose.msra.mxu0 0
        %976 = vmatprep.subr.bf16.mxu0 0
        %977 = vmatpush1.bf16.xpose.msra.mxu0 0
        %978 = vmatprep.subr.bf16.mxu0 0
        %979 = vmatpush1.bf16.xpose.msra.mxu0 0
        %980 = vmatprep.subr.bf16.mxu0 0
        %981 = vmatpush1.bf16.xpose.msra.mxu0 0
        %982 = vmatprep.subr.bf16.mxu0 0
        %983 = vmatpush1.bf16.xpose.msra.mxu0 0
        %984 = vmatprep.subr.bf16.mxu0 0
        %985 = vmatpush1.bf16.xpose.msra.mxu0 0
        %986 = vmatprep.mubr.bf16.mxu0 0
        %987 = vmatmul.mubr.bf16.gmra.mrb[0].mxu0 %v949
        %v988 = vpop.f32.mrb[0].mxu0
        %v989 = vadd.f32 0.0, %v988
        %v990 = vpop.f32.mrb[0].mxu0
        %v991 = vpop.f32.mrb[0].mxu0
        %v992 = vpop.f32.mrb[0].mxu0
        %993 = vdwg.mxu0
        %v994 = vsel %vm718, %v989, -inf
        %995 = vmax.xlane.f32.xlu0 %v994
        %v996 = vpop.xlane.xlu0 %995
        %v997 = vsub.f32 %v989, %v996
        %v998 = vmul.f32 %v997, 1.442695
        %v999 = vpow.pop %v998
        %v1000 = vsel %vm718, %v999, 0.0
        %1001 = vadd.xlane.f32.xlu0 %v1000
        %v1002 = vpop.xlane.xlu0 %1001
        %v1003 = vrcp.pop %v1002
        %v1004 = vmul.f32 %v999, %v1003
        %v1005 = vpack.c.bf16 %v1004, %v1004
        %1006 = vrot.lane.b32.xlu0 %v717, 112
        %v1007 = vpop.permute.xlu0 %1006
        %v1009 = vsel %vm718, %v1005, 0
        %v1012 = vsel %vm780, %v1007, 0
        %1014 = vmatprep.subr.bf16.mxu0 0
        %1015 = vmatpush1.bf16.msra.mxu0 %v1012
        %1016 = vmatprep.subr.bf16.mxu0 0
        %1017 = vmatpush1.bf16.msra.mxu0 0
        %1018 = vmatprep.subr.bf16.mxu0 0
        %1019 = vmatpush1.bf16.msra.mxu0 0
        %1020 = vmatprep.subr.bf16.mxu0 0
        %1021 = vmatpush1.bf16.msra.mxu0 0
        %1022 = vmatprep.subr.bf16.mxu0 0
        %1023 = vmatpush1.bf16.msra.mxu0 0
        %1024 = vmatprep.subr.bf16.mxu0 0
        %1025 = vmatpush1.bf16.msra.mxu0 0
        %1026 = vmatprep.subr.bf16.mxu0 0
        %1027 = vmatpush1.bf16.msra.mxu0 0
        %1028 = vmatprep.subr.bf16.mxu0 0
        %1029 = vmatpush1.bf16.msra.mxu0 0
        %1030 = vmatprep.subr.bf16.mxu0 0
        %1031 = vmatpush1.bf16.msra.mxu0 0
        %1032 = vmatprep.subr.bf16.mxu0 0
        %1033 = vmatpush1.bf16.msra.mxu0 0
        %1034 = vmatprep.subr.bf16.mxu0 0
        %1035 = vmatpush1.bf16.msra.mxu0 0
        %1036 = vmatprep.subr.bf16.mxu0 0
        %1037 = vmatpush1.bf16.msra.mxu0 0
        %1038 = vmatprep.subr.bf16.mxu0 0
        %1039 = vmatpush1.bf16.msra.mxu0 0
        %1040 = vmatprep.subr.bf16.mxu0 0
        %1041 = vmatpush1.bf16.msra.mxu0 0
        %1042 = vmatprep.subr.bf16.mxu0 0
        %1043 = vmatpush1.bf16.msra.mxu0 0
        %1044 = vmatprep.subr.bf16.mxu0 0
        %1045 = vmatpush1.bf16.msra.mxu0 0
        %1046 = vmatprep.mubr.bf16.mxu0 0
        %1047 = vmatmul.mubr.bf16.gmra.mrb[0].mxu0 %v1009
        %v1048 = vpop.f32.mrb[0].mxu0
        %v1049 = vadd.f32 0.0, %v1048
        %v1050 = vpop.f32.mrb[0].mxu0
        %v1051 = vpop.f32.mrb[0].mxu0
        %v1052 = vpop.f32.mrb[0].mxu0
        %1053 = vdwg.mxu0
        %1055 = vrot.lane.b32.xlu0 %v1049, 16
        %v1056 = vpop.permute.xlu0 %1055
        %vm1058 = vcmask 195712
        %1059 = vst.msk [vmem:[#allocation2] sm:$0xff] %vm1058, %v1056
        %1060 = vrot.lane.b32.xlu0 %v715, 104
        %v1061 = vpop.permute.xlu0 %1060
        %1062 = vrot.lane.b32.xlu0 %v716, 104
        %v1063 = vpop.permute.xlu0 %1062
        %v1065 = vsel %vm718, %v1061, 0
        %v1068 = vsel %vm718, %v1063, 0
        %1070 = vmatprep.subr.bf16.mxu0 0
        %1071 = vmatpush1.bf16.xpose.msra.mxu0 %v1068
        %1072 = vmatprep.subr.bf16.mxu0 0
        %1073 = vmatpush1.bf16.xpose.msra.mxu0 0
        %1074 = vmatprep.subr.bf16.mxu0 0
        %1075 = vmatpush1.bf16.xpose.msra.mxu0 0
        %1076 = vmatprep.subr.bf16.mxu0 0
        %1077 = vmatpush1.bf16.xpose.msra.mxu0 0
        %1078 = vmatprep.subr.bf16.mxu0 0
        %1079 = vmatpush1.bf16.xpose.msra.mxu0 0
        %1080 = vmatprep.subr.bf16.mxu0 0
        %1081 = vmatpush1.bf16.xpose.msra.mxu0 0
        %1082 = vmatprep.subr.bf16.mxu0 0
        %1083 = vmatpush1.bf16.xpose.msra.mxu0 0
        %1084 = vmatprep.subr.bf16.mxu0 0
        %1085 = vmatpush1.bf16.xpose.msra.mxu0 0
        %1086 = vmatprep.subr.bf16.mxu0 0
        %1087 = vmatpush1.bf16.xpose.msra.mxu0 0
        %1088 = vmatprep.subr.bf16.mxu0 0
        %1089 = vmatpush1.bf16.xpose.msra.mxu0 0
        %1090 = vmatprep.subr.bf16.mxu0 0
        %1091 = vmatpush1.bf16.xpose.msra.mxu0 0
        %1092 = vmatprep.subr.bf16.mxu0 0
        %1093 = vmatpush1.bf16.xpose.msra.mxu0 0
        %1094 = vmatprep.subr.bf16.mxu0 0
        %1095 = vmatpush1.bf16.xpose.msra.mxu0 0
        %1096 = vmatprep.subr.bf16.mxu0 0
        %1097 = vmatpush1.bf16.xpose.msra.mxu0 0
        %1098 = vmatprep.subr.bf16.mxu0 0
        %1099 = vmatpush1.bf16.xpose.msra.mxu0 0
        %1100 = vmatprep.subr.bf16.mxu0 0
        %1101 = vmatpush1.bf16.xpose.msra.mxu0 0
        %1102 = vmatprep.mubr.bf16.mxu0 0
        %1103 = vmatmul.mubr.bf16.gmra.mrb[0].mxu0 %v1065
        %v1104 = vpop.f32.mrb[0].mxu0
        %v1105 = vadd.f32 0.0, %v1104
        %v1106 = vpop.f32.mrb[0].mxu0
        %v1107 = vpop.f32.mrb[0].mxu0
        %v1108 = vpop.f32.mrb[0].mxu0
        %1109 = vdwg.mxu0
        %v1110 = vsel %vm718, %v1105, -inf
        %1111 = vmax.xlane.f32.xlu0 %v1110
        %v1112 = vpop.xlane.xlu0 %1111
        %v1113 = vsub.f32 %v1105, %v1112
        %v1114 = vmul.f32 %v1113, 1.442695
        %v1115 = vpow.pop %v1114
        %v1116 = vsel %vm718, %v1115, 0.0
        %1117 = vadd.xlane.f32.xlu0 %v1116
        %v1118 = vpop.xlane.xlu0 %1117
        %v1119 = vrcp.pop %v1118
        %v1120 = vmul.f32 %v1115, %v1119
        %v1121 = vpack.c.bf16 %v1120, %v1120
        %1122 = vrot.lane.b32.xlu0 %v717, 104
        %v1123 = vpop.permute.xlu0 %1122
        %v1125 = vsel %vm718, %v1121, 0
        %v1128 = vsel %vm780, %v1123, 0
        %1130 = vmatprep.subr.bf16.mxu0 0
        %1131 = vmatpush1.bf16.msra.mxu0 %v1128
        %1132 = vmatprep.subr.bf16.mxu0 0
        %1133 = vmatpush1.bf16.msra.mxu0 0
        %1134 = vmatprep.subr.bf16.mxu0 0
        %1135 = vmatpush1.bf16.msra.mxu0 0
        %1136 = vmatprep.subr.bf16.mxu0 0
        %1137 = vmatpush1.bf16.msra.mxu0 0
        %1138 = vmatprep.subr.bf16.mxu0 0
        %1139 = vmatpush1.bf16.msra.mxu0 0
        %1140 = vmatprep.subr.bf16.mxu0 0
        %1141 = vmatpush1.bf16.msra.mxu0 0
        %1142 = vmatprep.subr.bf16.mxu0 0
        %1143 = vmatpush1.bf16.msra.mxu0 0
        %1144 = vmatprep.subr.bf16.mxu0 0
        %1145 = vmatpush1.bf16.msra.mxu0 0
        %1146 = vmatprep.subr.bf16.mxu0 0
        %1147 = vmatpush1.bf16.msra.mxu0 0
        %1148 = vmatprep.subr.bf16.mxu0 0
        %1149 = vmatpush1.bf16.msra.mxu0 0
        %1150 = vmatprep.subr.bf16.mxu0 0
        %1151 = vmatpush1.bf16.msra.mxu0 0
        %1152 = vmatprep.subr.bf16.mxu0 0
        %1153 = vmatpush1.bf16.msra.mxu0 0
        %1154 = vmatprep.subr.bf16.mxu0 0
        %1155 = vmatpush1.bf16.msra.mxu0 0
        %1156 = vmatprep.subr.bf16.mxu0 0
        %1157 = vmatpush1.bf16.msra.mxu0 0
        %1158 = vmatprep.subr.bf16.mxu0 0
        %1159 = vmatpush1.bf16.msra.mxu0 0
        %1160 = vmatprep.subr.bf16.mxu0 0
        %1161 = vmatpush1.bf16.msra.mxu0 0
        %1162 = vmatprep.mubr.bf16.mxu0 0
        %1163 = vmatmul.mubr.bf16.gmra.mrb[0].mxu0 %v1125
        %v1164 = vpop.f32.mrb[0].mxu0
        %v1165 = vadd.f32 0.0, %v1164
        %v1166 = vpop.f32.mrb[0].mxu0
        %v1167 = vpop.f32.mrb[0].mxu0
        %v1168 = vpop.f32.mrb[0].mxu0
        %1169 = vdwg.mxu0
        %1171 = vrot.lane.b32.xlu0 %v1165, 24
        %v1172 = vpop.permute.xlu0 %1171
        %vm1174 = vcmask 261312
        %1175 = vst.msk [vmem:[#allocation2] sm:$0xff] %vm1174, %v1172
        %v1176 = vld [vmem:[#allocation2] sm:$0xff]
        %v1177 = vpack.c.bf16 %v1176, %v1176
        %v1178 = vld [vmem:[#allocation8] sm:$0xf]
        %v1179 = vld [vmem:[#allocation8 + $0x4] sm:$0xf]
        %v1180 = vld [vmem:[#allocation8 + $0x8] sm:$0xf]
        %v1181 = vld [vmem:[#allocation8 + $0xc] sm:$0xf]
        %v1182 = vld [vmem:[#allocation9] sm:$0x1]
        %v1184 = vlaneseq
        %v1185 = vshrl.u32 %v1184, 7
        %v1186 = vsub.s32 0, %v1185
        %v1187 = vrot.slane %v1182, %v1186
        %v1193 = vunpack.c.l.b16 %v1178
        %v1194 = vunpack.c.l.b16 %v1179
        %v1195 = vunpack.c.l.b16 %v1180
        %v1196 = vunpack.c.l.b16 %v1181
        %v1197 = vpack.c.b16 %v1194, %v1193
        %v1198 = vpack.c.b16 %v1196, %v1195
        %v1202 = vsel %vm541, %v1177, 0
        %1204 = vmatprep.subr.bf16.mxu0 0
        %1205 = vmatpush1.bf16.msra.mxu0 %v1197
        %1206 = vmatprep.subr.bf16.mxu0 0
        %1207 = vmatpush1.bf16.msra.mxu0 %v1198
        %1208 = vmatprep.subr.bf16.mxu0 0
        %1209 = vmatpush1.bf16.msra.mxu0 0
        %1210 = vmatprep.subr.bf16.mxu0 0
        %1211 = vmatpush1.bf16.msra.mxu0 0
        %1212 = vmatprep.subr.bf16.mxu0 0
        %1213 = vmatpush1.bf16.msra.mxu0 0
        %1214 = vmatprep.subr.bf16.mxu0 0
        %1215 = vmatpush1.bf16.msra.mxu0 0
        %1216 = vmatprep.subr.bf16.mxu0 0
        %1217 = vmatpush1.bf16.msra.mxu0 0
        %1218 = vmatprep.subr.bf16.mxu0 0
        %1219 = vmatpush1.bf16.msra.mxu0 0
        %1220 = vmatprep.subr.bf16.mxu0 0
        %1221 = vmatpush1.bf16.msra.mxu0 0
        %1222 = vmatprep.subr.bf16.mxu0 0
        %1223 = vmatpush1.bf16.msra.mxu0 0
        %1224 = vmatprep.subr.bf16.mxu0 0
        %1225 = vmatpush1.bf16.msra.mxu0 0
        %1226 = vmatprep.subr.bf16.mxu0 0
        %1227 = vmatpush1.bf16.msra.mxu0 0
        %1228 = vmatprep.subr.bf16.mxu0 0
        %1229 = vmatpush1.bf16.msra.mxu0 0
        %1230 = vmatprep.subr.bf16.mxu0 0
        %1231 = vmatpush1.bf16.msra.mxu0 0
        %1232 = vmatprep.subr.bf16.mxu0 0
        %1233 = vmatpush1.bf16.msra.mxu0 0
        %1234 = vmatprep.subr.bf16.mxu0 0
        %1235 = vmatpush1.bf16.msra.mxu0 0
        %1236 = vmatprep.mubr.bf16.mxu0 0
        %1237 = vmatmul.mubr.bf16.gmra.mrb[0].mxu0 %v1202
        %v1238 = vpop.f32.mrb[0].mxu0
        %v1239 = vadd.f32 %v1187, %v1238
        %v1240 = vpop.f32.mrb[0].mxu0
        %v1241 = vpop.f32.mrb[0].mxu0
        %v1242 = vpop.f32.mrb[0].mxu0
        %1243 = vdwg.mxu0
        %v1244 = vpack.c.bf16 %v1239, %v1239
        %v1245 = vld [vmem:[%s9] sm:$0xf]
        %v1246 = vld [vmem:[%s9 + $0x4] sm:$0xf]
        %v1247 = vld [vmem:[%s9 + $0x8] sm:$0xf]
        %v1248 = vld [vmem:[%s9 + $0xc] sm:$0xf]
        %v1249 = vld [vmem:[%s10] sm:$0x1]
        %v1251 = vlaneseq
        %v1252 = vshrl.u32 %v1251, 7
        %v1253 = vsub.s32 0, %v1252
        %v1254 = vrot.slane %v1249, %v1253
        %v1260 = vunpack.c.l.b16 %v1245
        %v1261 = vunpack.c.l.b16 %v1246
        %v1262 = vunpack.c.l.b16 %v1247
        %v1263 = vunpack.c.l.b16 %v1248
        %v1264 = vpack.c.b16 %v1261, %v1260
        %v1265 = vpack.c.b16 %v1263, %v1262
        %v1269 = vsel %vm541, %v1244, 0
        %1271 = vmatprep.subr.bf16.mxu0 0
        %1272 = vmatpush1.bf16.msra.mxu0 %v1264
        %1273 = vmatprep.subr.bf16.mxu0 0
        %1274 = vmatpush1.bf16.msra.mxu0 %v1265
        %1275 = vmatprep.subr.bf16.mxu0 0
        %1276 = vmatpush1.bf16.msra.mxu0 0
        %1277 = vmatprep.subr.bf16.mxu0 0
        %1278 = vmatpush1.bf16.msra.mxu0 0
        %1279 = vmatprep.subr.bf16.mxu0 0
        %1280 = vmatpush1.bf16.msra.mxu0 0
        %1281 = vmatprep.subr.bf16.mxu0 0
        %1282 = vmatpush1.bf16.msra.mxu0 0
        %1283 = vmatprep.subr.bf16.mxu0 0
        %1284 = vmatpush1.bf16.msra.mxu0 0
        %1285 = vmatprep.subr.bf16.mxu0 0
        %1286 = vmatpush1.bf16.msra.mxu0 0
        %1287 = vmatprep.subr.bf16.mxu0 0
        %1288 = vmatpush1.bf16.msra.mxu0 0
        %1289 = vmatprep.subr.bf16.mxu0 0
        %1290 = vmatpush1.bf16.msra.mxu0 0
        %1291 = vmatprep.subr.bf16.mxu0 0
        %1292 = vmatpush1.bf16.msra.mxu0 0
        %1293 = vmatprep.subr.bf16.mxu0 0
        %1294 = vmatpush1.bf16.msra.mxu0 0
        %1295 = vmatprep.subr.bf16.mxu0 0
        %1296 = vmatpush1.bf16.msra.mxu0 0
        %1297 = vmatprep.subr.bf16.mxu0 0
        %1298 = vmatpush1.bf16.msra.mxu0 0
        %1299 = vmatprep.subr.bf16.mxu0 0
        %1300 = vmatpush1.bf16.msra.mxu0 0
        %1301 = vmatprep.subr.bf16.mxu0 0
        %1302 = vmatpush1.bf16.msra.mxu0 0
        %1303 = vmatprep.mubr.bf16.mxu0 0
        %1304 = vmatmul.mubr.bf16.gmra.mrb[0].mxu0 %v1269
        %v1305 = vpop.f32.mrb[0].mxu0
        %v1306 = vadd.f32 %v1254, %v1305
        %v1307 = vpop.f32.mrb[0].mxu0
        %v1308 = vpop.f32.mrb[0].mxu0
        %v1309 = vpop.f32.mrb[0].mxu0
        %1310 = vdwg.mxu0
        %v1311 = vmax.f32 %v1306, 0.0
        %v1312 = vpack.c.bf16 %v1311, %v1311
        %v1313 = vld [vmem:[%s11] sm:$0xf]
        %v1314 = vld [vmem:[%s11 + $0x4] sm:$0xf]
        %v1315 = vld [vmem:[%s11 + $0x8] sm:$0xf]
        %v1316 = vld [vmem:[%s11 + $0xc] sm:$0xf]
        %v1317 = vld [vmem:[%s11 + $0x10] sm:$0xf]
        %v1318 = vld [vmem:[%s11 + $0x14] sm:$0xf]
        %v1319 = vld [vmem:[%s11 + $0x18] sm:$0xf]
        %v1320 = vld [vmem:[%s11 + $0x1c] sm:$0xf]
        %v1321 = vld [vmem:[%s12] sm:$0x1]
        %v1323 = vlaneseq
        %v1324 = vshrl.u32 %v1323, 7
        %v1325 = vsub.s32 0, %v1324
        %v1326 = vrot.slane %v1321, %v1325
        %v1336 = vunpack.c.l.b16 %v1313
        %v1337 = vunpack.c.l.b16 %v1314
        %v1338 = vunpack.c.l.b16 %v1315
        %v1339 = vunpack.c.l.b16 %v1316
        %v1340 = vunpack.c.l.b16 %v1317
        %v1341 = vunpack.c.l.b16 %v1318
        %v1342 = vunpack.c.l.b16 %v1319
        %v1343 = vunpack.c.l.b16 %v1320
        %v1344 = vpack.c.b16 %v1337, %v1336
        %v1345 = vpack.c.b16 %v1339, %v1338
        %v1346 = vpack.c.b16 %v1341, %v1340
        %v1347 = vpack.c.b16 %v1343, %v1342
        %vm1352 = vcmask 523264
        %v1354 = vsel %vm1352, %v1312, 0
        %1356 = vmatprep.subr.bf16.mxu0 0
        %1357 = vmatpush1.bf16.msra.mxu0 %v1344
        %1358 = vmatprep.subr.bf16.mxu0 0
        %1359 = vmatpush1.bf16.msra.mxu0 %v1345
        %1360 = vmatprep.subr.bf16.mxu0 0
        %1361 = vmatpush1.bf16.msra.mxu0 %v1346
        %1362 = vmatprep.subr.bf16.mxu0 0
        %1363 = vmatpush1.bf16.msra.mxu0 %v1347
        %1364 = vmatprep.subr.bf16.mxu0 0
        %1365 = vmatpush1.bf16.msra.mxu0 0
        %1366 = vmatprep.subr.bf16.mxu0 0
        %1367 = vmatpush1.bf16.msra.mxu0 0
        %1368 = vmatprep.subr.bf16.mxu0 0
        %1369 = vmatpush1.bf16.msra.mxu0 0
        %1370 = vmatprep.subr.bf16.mxu0 0
        %1371 = vmatpush1.bf16.msra.mxu0 0
        %1372 = vmatprep.subr.bf16.mxu0 0
        %1373 = vmatpush1.bf16.msra.mxu0 0
        %1374 = vmatprep.subr.bf16.mxu0 0
        %1375 = vmatpush1.bf16.msra.mxu0 0
        %1376 = vmatprep.subr.bf16.mxu0 0
        %1377 = vmatpush1.bf16.msra.mxu0 0
        %1378 = vmatprep.subr.bf16.mxu0 0
        %1379 = vmatpush1.bf16.msra.mxu0 0
        %1380 = vmatprep.subr.bf16.mxu0 0
        %1381 = vmatpush1.bf16.msra.mxu0 0
        %1382 = vmatprep.subr.bf16.mxu0 0
        %1383 = vmatpush1.bf16.msra.mxu0 0
        %1384 = vmatprep.subr.bf16.mxu0 0
        %1385 = vmatpush1.bf16.msra.mxu0 0
        %1386 = vmatprep.subr.bf16.mxu0 0
        %1387 = vmatpush1.bf16.msra.mxu0 0
        %1388 = vmatprep.mubr.bf16.mxu0 0
        %1389 = vmatmul.mubr.bf16.gmra.mrb[0].mxu0 %v1354
        %v1390 = vpop.f32.mrb[0].mxu0
        %v1391 = vadd.f32 %v1326, %v1390
        %v1392 = vpop.f32.mrb[0].mxu0
        %v1393 = vpop.f32.mrb[0].mxu0
        %v1394 = vpop.f32.mrb[0].mxu0
        %1395 = vdwg.mxu0
        %1396 = vst.msk [vmem:[%s509] sm:$0xff] %vm541, %v1391
        %s1397 = sand.u32 %s332, 1
        %s1398 = scalar_lea.sflag [#allocation5], %s1397
        %s1399 = sand.u32 %s332, 1
        %s1400 = smul.addr %s1399, 8
        %s1401 = scalar_lea.vmem [#allocation11], %s1400
        // Predicated region
        $region89: #{tpu_custom_call.1} parent=71 // pred_check
          %p1402 = pneg %p342
        $region90: #{tpu_custom_call.1} parent=71 // pred_check_branch
          %1404 = sbr.rel (%p1402) target = $region92
        $region91: #{tpu_custom_call.1} parent=71 // pred_region
          %s1406 = ssub.s32 128, 128
          %1407 = vsyncadd %s1398, %s1406
          %s1408 = sadd.s32 %s37, %s36
          %s1409 = smul.addr %s1408, 128
          %s1410 = scalar_lea.hbm %s13, %s1409
          %s1412 = sshll.u32 %s1401, 4
          %s1413 = int_to_ptr.vmem [resolvable:$true] %s1412
          %1415 = dma.vmem_to_hbm [thread:$0]  %s1413, 128, %s1410, %s1398
        $region92: #{tpu_custom_call.1} parent=71 // pred_fallthru
          _
      $region72: #{tpu_custom_call.1} parent=5 // pred_fallthru
        _
      %p1416 = scmp.le.s32.totalorder 2, %s27
      // Predicated region
      $region93: #{tpu_custom_call.1} parent=5 // pred_check
        %p1417 = pneg %p1416
      $region94: #{tpu_custom_call.1} parent=5 // pred_check_branch
        %1419 = sbr.rel (%p1417) target = $region96
      $region95: #{tpu_custom_call.1} parent=5 // pred_region
        %s1420 = ssub.s32 %s27, 2
        // Predicated region
        $region97: #{tpu_custom_call.1} parent=95 // pred_check
          %p1421 = pneg %p348
        $region98: #{tpu_custom_call.1} parent=95 // pred_check_branch
          %1423 = sbr.rel (%p1421) target = $region100
        $region99: #{tpu_custom_call.1} parent=95 // pred_region
          %s1424 = sand.u32 %s333, 1
          %s1425 = scalar_lea.sflag [#allocation5], %s1424
          %s1426 = sand.u32 %s333, 1
          %s1427 = smul.addr %s1426, 8
          %s1428 = scalar_lea.vmem [#allocation11], %s1427
          %1429 = dma.done %s1425, 128
        $region100: #{tpu_custom_call.1} parent=95 // pred_fallthru
          _
      $region96: #{tpu_custom_call.1} parent=5 // pred_fallthru
        _
    $region6: #{tpu_custom_call.1} parent=1 // loop_footer
      %s31 = sadd.s32 1, %s27
    $region7: #{tpu_custom_call.1} parent=1 // loop_footer_branch
      %26 = sbr.rel target = $region3
    $region8: #{tpu_custom_call.1} parent=1 // loop_exit
      _
    %1430 = vsyncpa [#allocation4], 1
    %s1431 = scalar_lea.sflag [#allocation4], 1
    %1432 = vsyncpa %s1431, 1
    %1433 = vsyncpa [#allocation7], 1
    %1434 = vsyncpa [#allocation10], 1
    %1435 = vsyncpa [#allocation5], 1
    %s1436 = scalar_lea.sflag [#allocation5], 1
    %1437 = vsyncpa %s1436, 1

</llo_original>
